<compile_context>
chip_gen: v7x
topology: tpu7x:2x2x1
jax: 0.10.0
libtpu: 0.0.40
codegen_flags: <defaults>
</compile_context>

<pallas_src>
import math

import jax
import jax.numpy as jnp
from jax import lax
from jax.experimental import pallas as pl
from jax.experimental.pallas import tpu as pltpu


# ---------------------------------------------------------------------------
# helpers
# ---------------------------------------------------------------------------
def _round_up(x, m):
    return -(-x // m) * m


def _vmem_limit(est_bytes):
    """2x the per-step working-set estimate, capped at 0.85x physical VMEM."""
    cap = None
    try:
        cap = getattr(pltpu.get_tpu_info(), "vmem_capacity_bytes", None)
    except Exception:
        cap = None
    if not cap:
        cap = 64 * 1024 * 1024          # conservative default (v7x physical)
    cap = int(0.85 * cap)               # headroom for Mosaic internal scratch
    return int(min(max(2 * est_bytes, 16 * 1024 * 1024), cap))


def _pick_rows(h, w, sublane_mult, max_rows):
    """Largest TH dividing h with (TH*w) % sublane_mult == 0 (or TH == h,
    i.e. the full extent) and TH*w <= max_rows.  sublane_mult is dtype-aware:
    16 for bf16 output blocks, 8 for f32."""
    cands = [th for th in range(1, h + 1)
             if h % th == 0 and ((th * w) % sublane_mult == 0 or th == h)]
    fitting = [th for th in cands if th * w <= max_rows]
    return max(fitting) if fitting else min(cands)


_RESIDENT_SINGLE_BUFFER_BYTES = 8 * 1024 * 1024


def _resident_block_spec(block_shape, index_map, block_bytes):
    """Per-batch-resident activation block.  When the block is large,
    single-buffer it so the VMEM footprint is ~1x (not 2x) the image, which
    matters on v7x's 64 MiB VMEM.  Falls back cleanly on older jax."""
    if block_bytes >= _RESIDENT_SINGLE_BUFFER_BYTES and hasattr(pl, "Buffered"):
        try:
            return pl.BlockSpec(block_shape, index_map,
                                pipeline_mode=pl.Buffered(1))
        except TypeError:
            pass
    return pl.BlockSpec(block_shape, index_map)


# ---------------------------------------------------------------------------
# Kernel 1: 3x3 stride-1 conv + folded BN + ReLU  (K = 3*Cin per dot)
# ---------------------------------------------------------------------------
def conv1_bn_relu(x, w_hwio, bn_scale, bn_bias, *, max_tile_rows=1024):
    """Returns (y_flat, cp): y_flat is (B, H*W, cp) bf16 with output channels
    zero-padded to a multiple of 128 (padded lanes are exactly 0)."""
    B, H, W, Cin = x.shape
    Cout = w_hwio.shape[-1]
    cp = _round_up(Cout, 128)

    xp = jnp.pad(x.astype(jnp.bfloat16), ((0, 0), (1, 1), (1, 1), (0, 0)))
    # K-folded weights: W_kw has shape (3*Cin, cp), rows ordered kh-major.
    wk = jnp.pad(w_hwio, ((0, 0), (0, 0), (0, 0), (0, cp - Cout)))
    wk = wk.transpose(1, 0, 2, 3).reshape(3, 3 * Cin, cp).astype(jnp.bfloat16)
    scale = jnp.pad(bn_scale.astype(jnp.float32), (0, cp - Cout)).reshape(1, cp)
    bias = jnp.pad(bn_bias.astype(jnp.float32), (0, cp - Cout)).reshape(1, cp)

    th = _pick_rows(H, W, 16, max_tile_rows)          # bf16 output -> x16
    n_tiles = H // th

    def kernel(x_ref, w_ref, s_ref, b_ref, o_ref):
        r0 = pl.program_id(1) * th
        # Partial im2col: fold the 3 kh row taps into the contraction axis.
        rows = [x_ref[0, pl.ds(r0 + kh, th), :, :] for kh in range(3)]
        patch = jnp.concatenate(rows, axis=-1)            # (th, W+2, 3*Cin)
        acc = None
        for kw in range(3):                               # 3 dots, K = 3*Cin
            lhs = patch[:, kw:kw + W, :].reshape(th * W, 3 * Cin)
            d = jnp.dot(lhs, w_ref[kw], preferred_element_type=jnp.float32)
            acc = d if acc is None else acc + d           # SSA accumulation
        # Folded-BN + ReLU epilogue in f32 (padded lanes: relu(0) = 0).
        y = jnp.maximum(acc * s_ref[...] + b_ref[...], 0.0)
        o_ref[0] = y.astype(o_ref.dtype)

    x_block = (1, H + 2, W + 2, Cin)
    x_bytes = math.prod(x_block) * 2
    est = (2 * x_bytes + 2 * th * W * cp * 2 + 9 * Cin * cp * 2
           + th * (W + 2) * 3 * Cin * 2 + th * W * cp * 4 + 8 * cp)

    y_flat = pl.pallas_call(
        kernel,
        out_shape=jax.ShapeDtypeStruct((B, H * W, cp), jnp.bfloat16),
        grid_spec=pltpu.PrefetchScalarGridSpec(
            num_scalar_prefetch=0,
            grid=(B, n_tiles),
            in_specs=[
                _resident_block_spec(x_block, lambda b, t: (b, 0, 0, 0), x_bytes),
                pl.BlockSpec((3, 3 * Cin, cp), lambda b, t: (0, 0, 0)),
                pl.BlockSpec((1, cp), lambda b, t: (0, 0)),
                pl.BlockSpec((1, cp), lambda b, t: (0, 0)),
            ],
            out_specs=pl.BlockSpec((1, th * W, cp), lambda b, t: (b, t, 0)),
        ),
        compiler_params=pltpu.CompilerParams(
            dimension_semantics=("parallel", "parallel"),
            vmem_limit_bytes=_vmem_limit(est)),
    )(xp, wk, scale, bias)
    return y_flat, cp


# ---------------------------------------------------------------------------
# Kernel 2: 3x3 stride-2 conv + folded BN + ReLU + fused spatial max
#           (K = 3*Cin_pad per dot; no strided VMEM loads)
# ---------------------------------------------------------------------------
def down_bn_relu_maxpool(xp2, w_hwio, bn_scale, bn_bias, cin_real, *,
                         max_tile_rows=1024):
    """xp2: (B, H+2, (W+2)//2, 2*cp) bf16 -- spatially padded, channel-padded
    conv1 activation with column pairs folded into the channel axis (a free
    reshape of the NHWC layout).

    Returns (y_flat, part_max, cd_pad): y_flat (B, Ho*Wo, cd_pad) bf16;
    part_max (B, 8*n_tiles, cd_pad) f32 per-tile partial spatial maxima."""
    B, Hp, Wp2, two_cp = xp2.shape
    cp = two_cp // 2
    H, W = Hp - 2, 2 * Wp2 - 2
    Ho, Wo = H // 2, W // 2
    Cd = w_hwio.shape[-1]
    cd_pad = _round_up(Cd, 128)

    # K-folded weights: W_kh has shape (3*cp, cd_pad), rows ordered kw-major;
    # the Cin dim is zero-padded to cp so the padded activation feeds in directly.
    wk = jnp.pad(w_hwio, ((0, 0), (0, 0), (0, cp - cin_real), (0, cd_pad - Cd)))
    wk = wk.reshape(3, 3 * cp, cd_pad).astype(jnp.bfloat16)
    scale = jnp.pad(bn_scale.astype(jnp.float32), (0, cd_pad - Cd)).reshape(1, cd_pad)
    bias = jnp.pad(bn_bias.astype(jnp.float32), (0, cd_pad - Cd)).reshape(1, cd_pad)

    tho = _pick_rows(Ho, Wo, 16, max_tile_rows)       # bf16 output -> x16
    n_tiles = Ho // tho

    def kernel(x_ref, w_ref, s_ref, b_ref, o_ref, mx_ref):
        ro0 = pl.program_id(1) * tho
        # Even/odd input rows via contiguous loads + value reshape.
        blk_a = x_ref[0, pl.ds(2 * ro0, 2 * tho), :, :].reshape(tho, 2, Wp2, two_cp)
        blk_b = x_ref[0, pl.ds(2 * ro0 + 2, 2 * tho), :, :].reshape(tho, 2, Wp2, two_cp)
        rows = (blk_a[:, 0], blk_a[:, 1], blk_b[:, 0])     # kh = 0, 1, 2
        acc = None
        for kh in range(3):                                 # 3 dots, K = 3*cp
            rk = rows[kh]                                   # (tho, Wp2, 2*cp)
            # Stride-2 column window == pair co (2*cp ch) ++ first cp of pair co+1.
            lhs = jnp.concatenate([rk[:, :Wo, :], rk[:, 1:Wo + 1, :cp]], axis=-1)
            d = jnp.dot(lhs.reshape(tho * Wo, 3 * cp), w_ref[kh],
                        preferred_element_type=jnp.float32)
            acc = d if acc is None else acc + d             # SSA accumulation
        y = jnp.maximum(acc * s_ref[...] + b_ref[...], 0.0)
        o_ref[0] = y.astype(o_ref.dtype)
        # Per-tile partial spatial max (exact; reduced again in XLA).  Written
        # per (b, t) so both grid axes stay "parallel" (megacore-friendly).
        if (tho * Wo) % 8 == 0:
            mx_ref[0] = jnp.max(y.reshape(-1, 8, cd_pad), axis=0)
        else:
            mx_ref[0] = jnp.broadcast_to(jnp.max(y, axis=0, keepdims=True),
                                         (8, cd_pad))

    x_block = (1, Hp, Wp2, two_cp)
    x_bytes = math.prod(x_block) * 2
    est = (2 * x_bytes + 2 * tho * Wo * cd_pad * 2 + 2 * 8 * cd_pad * 4
           + 9 * cp * cd_pad * 2 + tho * Wo * 3 * cp * 2
           + tho * Wo * cd_pad * 4 + 8 * cd_pad)

    y_flat, part_max = pl.pallas_call(
        kernel,
        out_shape=(jax.ShapeDtypeStruct((B, Ho * Wo, cd_pad), jnp.bfloat16),
                   jax.ShapeDtypeStruct((B, 8 * n_tiles, cd_pad), jnp.float32)),
        grid_spec=pltpu.PrefetchScalarGridSpec(
            num_scalar_prefetch=0,
            grid=(B, n_tiles),
            in_specs=[
                _resident_block_spec(x_block, lambda b, t: (b, 0, 0, 0), x_bytes),
                pl.BlockSpec((3, 3 * cp, cd_pad), lambda b, t: (0, 0, 0)),
                pl.BlockSpec((1, cd_pad), lambda b, t: (0, 0)),
                pl.BlockSpec((1, cd_pad), lambda b, t: (0, 0)),
            ],
            out_specs=(pl.BlockSpec((1, tho * Wo, cd_pad), lambda b, t: (b, t, 0)),
                       pl.BlockSpec((1, 8, cd_pad), lambda b, t: (b, t, 0))),
        ),
        compiler_params=pltpu.CompilerParams(
            dimension_semantics=("parallel", "parallel"),
            vmem_limit_bytes=_vmem_limit(est)),
    )(xp2, wk, scale, bias)
    return y_flat, part_max, cd_pad


# ---------------------------------------------------------------------------
# Kernel 3: residual fuse  out = deep + shallow * channel_weight
#           (shallow arrives channel-padded bf16; upcast / un-pad in-kernel)
# ---------------------------------------------------------------------------
def residual_scale_add(deep, shallow_flat, cw, cd_pad, *,
                       max_block_bytes=4 * 1024 * 1024):
    B, Ho, Wo, Cd = deep.shape
    rows = Ho * Wo
    d2 = deep.reshape(B, rows, Cd)
    cw2 = cw.astype(jnp.float32).reshape(B, 1, Cd)

    row_bytes = Cd * deep.dtype.itemsize * 2 + cd_pad * 2
    r = _pick_rows(rows, 1, 16, max(16, max_block_bytes // row_bytes))
    n_tiles = rows // r

    def kernel(d_ref, s_ref, cw_ref, o_ref):
        sv = s_ref[0].astype(jnp.float32)
        if cd_pad != Cd:
            sv = sv[:, :Cd]
        o_ref[0] = (d_ref[0].astype(jnp.float32) + sv * cw_ref[0]).astype(o_ref.dtype)

    est = 2 * r * row_bytes + r * cd_pad * 4 + 8 * Cd * 4
    out = pl.pallas_call(
        kernel,
        out_shape=jax.ShapeDtypeStruct((B, rows, Cd), deep.dtype),
        grid_spec=pltpu.PrefetchScalarGridSpec(
            num_scalar_prefetch=0,
            grid=(B, n_tiles),
            in_specs=[
                pl.BlockSpec((1, r, Cd), lambda b, t: (b, t, 0)),
                pl.BlockSpec((1, r, cd_pad), lambda b, t: (b, t, 0)),
                pl.BlockSpec((1, 1, Cd), lambda b, t: (b, 0, 0)),
            ],
            out_specs=pl.BlockSpec((1, r, Cd), lambda b, t: (b, t, 0)),
        ),
        compiler_params=pltpu.CompilerParams(
            dimension_semantics=("parallel", "parallel"),
            vmem_limit_bytes=_vmem_limit(est)),
    )(d2, shallow_flat, cw2)
    return out.reshape(B, Ho, Wo, Cd)


# ---------------------------------------------------------------------------
# SEM forward (Pallas) and parameter construction
# ---------------------------------------------------------------------------
def sem_forward(deep, shallow, p, *, max_tile_rows=1024):
    B, H, W, Cs = shallow.shape
    assert H % 2 == 0 and W % 2 == 0, "stride-2 path assumes even H, W"

    # conv1: stride-1 3x3 + BN + ReLU -> channel-padded bf16, flat (B, H*W, cp).
    y1, cp = conv1_bn_relu(shallow, p["conv1_w"], p["conv1_scale"],
                           p["conv1_bias"], max_tile_rows=max_tile_rows)

    # Single XLA spatial pad, then a *free* reshape folds column pairs into the
    # channel axis so the stride-2 kernel only does stride-1 / reshape accesses.
    # TODO(synk): fuse this pad into conv1's output stores to drop the HBM pass.
    y1 = y1.reshape(B, H, W, cp)
    xp = jnp.pad(y1, ((0, 0), (1, 1), (1, 1), (0, 0)))
    xp2 = xp.reshape(B, H + 2, (W + 2) // 2, 2 * cp)

    y2, part_max, cd_pad = down_bn_relu_maxpool(
        xp2, p["down_w"], p["down_scale"], p["down_bias"], Cs,
        max_tile_rows=max_tile_rows)

    Cd = p["down_w"].shape[-1]
    chan_max = jnp.max(part_max, axis=1)[:, :Cd]          # AdaptiveMaxPool2d(1)
    # CAM MLP on the pooled (B, Cd) vector: negligible FLOPs -> plain JAX.
    h = jax.nn.sigmoid(chan_max @ p["fc1_w"] + p["fc1_b"])
    z = h @ p["fc2_w"] + p["fc2_b"]
    cw = jax.nn.sigmoid(z * p["cam_bn_scale"] + p["cam_bn_bias"])    # (B, Cd)
    return residual_scale_add(deep, y2, cw, cd_pad)


def make_params(key, c_shallow, c_deep, cam_ratio=16, eps=1e-5):
    ks = jax.random.split(key, 20)
    cr = c_deep // cam_ratio

    def bn_fold(kg, kb, km, kv, c):
        gamma = 0.5 + jax.random.uniform(kg, (c,), jnp.float32)
        beta = 0.1 * jax.random.normal(kb, (c,), jnp.float32)
        rmean = 0.1 * jax.random.normal(km, (c,), jnp.float32)
        rvar = 0.5 + jax.random.uniform(kv, (c,), jnp.float32)
        scale = gamma / jnp.sqrt(rvar + eps)
        return scale, beta - rmean * scale

    conv1_scale, conv1_bias = bn_fold(ks[1], ks[2], ks[3], ks[4], c_shallow)
    down_scale, down_bias = bn_fold(ks[6], ks[7], ks[8], ks[9], c_deep)
    cam_scale, cam_bias = bn_fold(ks[14], ks[15], ks[16], ks[17], c_deep)

    return {
        "conv1_w": 0.1 * jax.random.normal(ks[0], (3, 3, c_shallow, c_shallow), jnp.float32),
        "conv1_scale": conv1_scale, "conv1_bias": conv1_bias,
        "down_w": 0.1 * jax.random.normal(ks[5], (3, 3, c_shallow, c_deep), jnp.float32),
        "down_scale": down_scale, "down_bias": down_bias,
        "fc1_w": 0.2 * jax.random.normal(ks[10], (c_deep, cr), jnp.float32),
        "fc1_b": 0.1 * jax.random.normal(ks[11], (cr,), jnp.float32),
        "fc2_w": 0.2 * jax.random.normal(ks[12], (cr, c_deep), jnp.float32),
        "fc2_b": 0.1 * jax.random.normal(ks[13], (c_deep,), jnp.float32),
        "cam_bn_scale": cam_scale, "cam_bn_bias": cam_bias,
    }


# Pure-JAX f32 reference (inference-mode BN), used to sanity-check the kernels.
def ref_forward(deep, shallow, p):
    def conv_bn_relu(x, w, scale, bias, stride):
        y = lax.conv_general_dilated(
            x, w, (stride, stride), ((1, 1), (1, 1)),
            dimension_numbers=("NHWC", "HWIO", "NHWC"))
        return jnp.maximum(y * scale + bias, 0.0)

    s = conv_bn_relu(shallow, p["conv1_w"], p["conv1_scale"], p["conv1_bias"], 1)
    s = conv_bn_relu(s, p["down_w"], p["down_scale"], p["down_bias"], 2)
    m = jnp.max(s, axis=(1, 2))                                   # AdaptiveMaxPool2d(1)
    h = jax.nn.sigmoid(m @ p["fc1_w"] + p["fc1_b"])
    z = h @ p["fc2_w"] + p["fc2_b"]
    cw = jax.nn.sigmoid(z * p["cam_bn_scale"] + p["cam_bn_bias"])
    return deep + s * cw[:, None, None, :]


if __name__ == "__main__":
    # Small shapes consistent with SEM(channel_deep, channel_shallow, ratio=2):
    #   shallow: (B, H, W, channel_shallow)   deep: (B, H//2, W//2, channel_deep)
    B, H, W = 2, 16, 16
    C_SHALLOW, C_DEEP = 16, 32            # CAM ratio is hard-coded to 16 -> hidden=2

    key = jax.random.PRNGKey(0)
    k_sh, k_dp, k_par = jax.random.split(key, 3)
    shallow = jax.random.normal(k_sh, (B, H, W, C_SHALLOW), jnp.float32)
    deep = jax.random.normal(k_dp, (B, H // 2, W // 2, C_DEEP), jnp.float32)
    params = make_params(k_par, C_SHALLOW, C_DEEP)

    # Small row-tile budget so the spatial tiling / partial-max paths are
    # exercised even at toy resolution (default 1024 targets production shapes).
    fwd = jax.jit(lambda d, s, p: sem_forward(d, s, p, max_tile_rows=32))

    out = jax.block_until_ready(fwd(deep, shallow, params))
    ref = jax.block_until_ready(ref_forward(deep, shallow, params))

    assert out.shape == deep.shape and out.dtype == deep.dtype
    assert bool(jnp.all(jnp.isfinite(out)))
    assert bool(jnp.allclose(out, ref, atol=5e-2, rtol=5e-2)), (
        float(jnp.max(jnp.abs(out - ref))))
    print("KERNEL_OK")
</pallas_src>

<mosaic_0001>
module attributes {stable_mosaic.version = 11 : i64} {
  func.func @kernel(%arg0: i32, %arg1: i32, %arg2: memref<1x18x18x16xbf16, #tpu.memory_space<vmem>>, %arg3: memref<3x48x128xbf16, #tpu.memory_space<vmem>>, %arg4: memref<1x128xf32, #tpu.memory_space<vmem>>, %arg5: memref<1x128xf32, #tpu.memory_space<vmem>>, %arg6: memref<1x32x128xbf16, #tpu.memory_space<vmem>>) attributes {dimension_semantics = [#tpu.dimension_semantics<parallel>, #tpu.dimension_semantics<parallel>], iteration_bounds = array<i64: 2, 8>, scalar_prefetch = 0 : i64, scratch_operands = 0 : i64, tpu.core_type = #tpu.core_type<tc>, window_params = [{transform_indices = @transform_0, window_bounds = array<i64: 1, 18, 18, 16>}, {pipeline_mode = #tpu.pipeline_mode<synchronous>, transform_indices = @transform_1, window_bounds = array<i64: 3, 48, 128>}, {pipeline_mode = #tpu.pipeline_mode<synchronous>, transform_indices = @transform_2, window_bounds = array<i64: 1, 128>}, {pipeline_mode = #tpu.pipeline_mode<synchronous>, transform_indices = @transform_3, window_bounds = array<i64: 1, 128>}, {transform_indices = @transform_4, window_bounds = array<i64: 1, 32, 128>}]} {
    %c2_i32 = arith.constant 2 : i32
    %0 = arith.muli %arg1, %c2_i32 : i32
    %c0_i32 = arith.constant 0 : i32
    %1 = arith.addi %0, %c0_i32 : i32
    %c0 = arith.constant 0 : index
    %2 = arith.index_cast %1 : i32 to index
    %c0_0 = arith.constant 0 : index
    %c0_1 = arith.constant 0 : index
    %3 = vector.load %arg2[%c0, %2, %c0_0, %c0_1] : memref<1x18x18x16xbf16, #tpu.memory_space<vmem>>, vector<1x2x18x16xbf16>
    %4 = vector.shape_cast %3 : vector<1x2x18x16xbf16> to vector<2x18x16xbf16>
    %c1_i32 = arith.constant 1 : i32
    %5 = arith.addi %0, %c1_i32 : i32
    %c0_2 = arith.constant 0 : index
    %6 = arith.index_cast %5 : i32 to index
    %c0_3 = arith.constant 0 : index
    %c0_4 = arith.constant 0 : index
    %7 = vector.load %arg2[%c0_2, %6, %c0_3, %c0_4] : memref<1x18x18x16xbf16, #tpu.memory_space<vmem>>, vector<1x2x18x16xbf16>
    %8 = vector.shape_cast %7 : vector<1x2x18x16xbf16> to vector<2x18x16xbf16>
    %c2_i32_5 = arith.constant 2 : i32
    %9 = arith.addi %0, %c2_i32_5 : i32
    %c0_6 = arith.constant 0 : index
    %10 = arith.index_cast %9 : i32 to index
    %c0_7 = arith.constant 0 : index
    %c0_8 = arith.constant 0 : index
    %11 = vector.load %arg2[%c0_6, %10, %c0_7, %c0_8] : memref<1x18x18x16xbf16, #tpu.memory_space<vmem>>, vector<1x2x18x16xbf16>
    %12 = vector.shape_cast %11 : vector<1x2x18x16xbf16> to vector<2x18x16xbf16>
    %13 = tpu.concatenate %4, %8, %12 in 2 : vector<2x18x16xbf16>, vector<2x18x16xbf16>, vector<2x18x16xbf16> -> vector<2x18x48xbf16>
    %14 = vector.extract_strided_slice %13 {offsets = [0, 0, 0], sizes = [2, 16, 48], strides = [1, 1, 1]} : vector<2x18x48xbf16> to vector<2x16x48xbf16>
    %15 = vector.shape_cast %14 : vector<2x16x48xbf16> to vector<32x48xbf16>
    %c0_9 = arith.constant 0 : index
    %c0_10 = arith.constant 0 : index
    %c0_11 = arith.constant 0 : index
    %16 = vector.load %arg3[%c0_9, %c0_10, %c0_11] : memref<3x48x128xbf16, #tpu.memory_space<vmem>>, vector<1x48x128xbf16>
    %17 = vector.shape_cast %16 : vector<1x48x128xbf16> to vector<48x128xbf16>
    %cst = arith.constant dense<0.000000e+00> : vector<32x128xf32>
    %18 = tpu.matmul %15, %17, %cst {dimension_numbers = #tpu.dot_dimension_numbers<[1], [0], [0], [1], [0, 0, 1, 1], [], []>} : vector<32x48xbf16>, vector<48x128xbf16>, vector<32x128xf32> -> vector<32x128xf32>
    %19 = vector.extract_strided_slice %13 {offsets = [0, 1, 0], sizes = [2, 16, 48], strides = [1, 1, 1]} : vector<2x18x48xbf16> to vector<2x16x48xbf16>
    %20 = vector.shape_cast %19 : vector<2x16x48xbf16> to vector<32x48xbf16>
    %c1 = arith.constant 1 : index
    %c0_12 = arith.constant 0 : index
    %c0_13 = arith.constant 0 : index
    %21 = vector.load %arg3[%c1, %c0_12, %c0_13] : memref<3x48x128xbf16, #tpu.memory_space<vmem>>, vector<1x48x128xbf16>
    %22 = vector.shape_cast %21 : vector<1x48x128xbf16> to vector<48x128xbf16>
    %cst_14 = arith.constant dense<0.000000e+00> : vector<32x128xf32>
    %23 = tpu.matmul %20, %22, %cst_14 {dimension_numbers = #tpu.dot_dimension_numbers<[1], [0], [0], [1], [0, 0, 1, 1], [], []>} : vector<32x48xbf16>, vector<48x128xbf16>, vector<32x128xf32> -> vector<32x128xf32>
    %24 = arith.addf %18, %23 : vector<32x128xf32>
    %25 = vector.extract_strided_slice %13 {offsets = [0, 2, 0], sizes = [2, 16, 48], strides = [1, 1, 1]} : vector<2x18x48xbf16> to vector<2x16x48xbf16>
    %26 = vector.shape_cast %25 : vector<2x16x48xbf16> to vector<32x48xbf16>
    %c2 = arith.constant 2 : index
    %c0_15 = arith.constant 0 : index
    %c0_16 = arith.constant 0 : index
    %27 = vector.load %arg3[%c2, %c0_15, %c0_16] : memref<3x48x128xbf16, #tpu.memory_space<vmem>>, vector<1x48x128xbf16>
    %28 = vector.shape_cast %27 : vector<1x48x128xbf16> to vector<48x128xbf16>
    %cst_17 = arith.constant dense<0.000000e+00> : vector<32x128xf32>
    %29 = tpu.matmul %26, %28, %cst_17 {dimension_numbers = #tpu.dot_dimension_numbers<[1], [0], [0], [1], [0, 0, 1, 1], [], []>} : vector<32x48xbf16>, vector<48x128xbf16>, vector<32x128xf32> -> vector<32x128xf32>
    %30 = arith.addf %24, %29 : vector<32x128xf32>
    %c0_18 = arith.constant 0 : index
    %c0_19 = arith.constant 0 : index
    %31 = vector.load %arg4[%c0_18, %c0_19] : memref<1x128xf32, #tpu.memory_space<vmem>>, vector<1x128xf32>
    %32 = vector.broadcast %31 : vector<1x128xf32> to vector<32x128xf32>
    %33 = arith.mulf %30, %32 : vector<32x128xf32>
    %c0_20 = arith.constant 0 : index
    %c0_21 = arith.constant 0 : index
    %34 = vector.load %arg5[%c0_20, %c0_21] : memref<1x128xf32, #tpu.memory_space<vmem>>, vector<1x128xf32>
    %35 = vector.broadcast %34 : vector<1x128xf32> to vector<32x128xf32>
    %36 = arith.addf %33, %35 : vector<32x128xf32>
    %cst_22 = arith.constant 0.000000e+00 : f32
    %37 = vector.broadcast %cst_22 : f32 to vector<32x128xf32>
    %38 = arith.maximumf %36, %37 : vector<32x128xf32>
    %39 = arith.truncf %38 : vector<32x128xf32> to vector<32x128xbf16>
    %c0_23 = arith.constant 0 : index
    %c0_24 = arith.constant 0 : index
    %c0_25 = arith.constant 0 : index
    %40 = vector.load %arg6[%c0_23, %c0_24, %c0_25] : memref<1x32x128xbf16, #tpu.memory_space<vmem>>, vector<1x32x128xbf16>
    %41 = vector.shape_cast %40 : vector<1x32x128xbf16> to vector<32x128xbf16>
    %42 = vector.shape_cast %39 : vector<32x128xbf16> to vector<1x32x128xbf16>
    tpu.vector_store %arg6[%c0_23, %c0_24, %c0_25], %42 {strides = array<i32>} : memref<1x32x128xbf16, #tpu.memory_space<vmem>>, vector<1x32x128xbf16>,
    return
  }
  func.func @transform_0(%arg0: i32, %arg1: i32) -> (i32, i32, i32, i32) {
    %c0_i32 = arith.constant 0 : i32
    %c0_i32_0 = arith.constant 0 : i32
    %c0_i32_1 = arith.constant 0 : i32
    %c0_i32_2 = arith.constant 0 : i32
    return %arg0, %c0_i32, %c0_i32_0, %c0_i32_1 : i32, i32, i32, i32
  }
  func.func @transform_1(%arg0: i32, %arg1: i32) -> (i32, i32, i32) {
    %c0_i32 = arith.constant 0 : i32
    %c0_i32_0 = arith.constant 0 : i32
    %c0_i32_1 = arith.constant 0 : i32
    %c0_i32_2 = arith.constant 0 : i32
    return %c0_i32, %c0_i32_0, %c0_i32_1 : i32, i32, i32
  }
  func.func @transform_2(%arg0: i32, %arg1: i32) -> (i32, i32) {
    %c0_i32 = arith.constant 0 : i32
    %c0_i32_0 = arith.constant 0 : i32
    %c0_i32_1 = arith.constant 0 : i32
    return %c0_i32, %c0_i32_0 : i32, i32
  }
  func.func @transform_3(%arg0: i32, %arg1: i32) -> (i32, i32) {
    %c0_i32 = arith.constant 0 : i32
    %c0_i32_0 = arith.constant 0 : i32
    %c0_i32_1 = arith.constant 0 : i32
    return %c0_i32, %c0_i32_0 : i32, i32
  }
  func.func @transform_4(%arg0: i32, %arg1: i32) -> (i32, i32, i32) {
    %c0_i32 = arith.constant 0 : i32
    %c0_i32_0 = arith.constant 0 : i32
    return %arg0, %arg1, %c0_i32 : i32, i32, i32
  }
}

module attributes {stable_mosaic.version = 11 : i64} {
  func.func @kernel(%arg0: i32, %arg1: i32, %arg2: memref<1x18x9x256xbf16, #tpu.memory_space<vmem>>, %arg3: memref<3x384x128xbf16, #tpu.memory_space<vmem>>, %arg4: memref<1x128xf32, #tpu.memory_space<vmem>>, %arg5: memref<1x128xf32, #tpu.memory_space<vmem>>, %arg6: memref<1x32x128xbf16, #tpu.memory_space<vmem>>, %arg7: memref<1x8x128xf32, #tpu.memory_space<vmem>>) attributes {dimension_semantics = [#tpu.dimension_semantics<parallel>, #tpu.dimension_semantics<parallel>], iteration_bounds = array<i64: 2, 2>, scalar_prefetch = 0 : i64, scratch_operands = 0 : i64, tpu.core_type = #tpu.core_type<tc>, window_params = [{transform_indices = @transform_0, window_bounds = array<i64: 1, 18, 9, 256>}, {pipeline_mode = #tpu.pipeline_mode<synchronous>, transform_indices = @transform_1, window_bounds = array<i64: 3, 384, 128>}, {pipeline_mode = #tpu.pipeline_mode<synchronous>, transform_indices = @transform_2, window_bounds = array<i64: 1, 128>}, {pipeline_mode = #tpu.pipeline_mode<synchronous>, transform_indices = @transform_3, window_bounds = array<i64: 1, 128>}, {transform_indices = @transform_4, window_bounds = array<i64: 1, 32, 128>}, {transform_indices = @transform_5, window_bounds = array<i64: 1, 8, 128>}]} {
    %c4_i32 = arith.constant 4 : i32
    %0 = arith.muli %arg1, %c4_i32 : i32
    %c2_i32 = arith.constant 2 : i32
    %1 = arith.muli %c2_i32, %0 : i32
    %c0 = arith.constant 0 : index
    %2 = arith.index_cast %1 : i32 to index
    %c0_0 = arith.constant 0 : index
    %c0_1 = arith.constant 0 : index
    %3 = vector.load %arg2[%c0, %2, %c0_0, %c0_1] : memref<1x18x9x256xbf16, #tpu.memory_space<vmem>>, vector<1x8x9x256xbf16>
    %4 = vector.shape_cast %3 : vector<1x8x9x256xbf16> to vector<8x9x256xbf16>
    %5 = vector.shape_cast %4 : vector<8x9x256xbf16> to vector<4x2x9x256xbf16>
    %c2_i32_2 = arith.constant 2 : i32
    %6 = arith.muli %c2_i32_2, %0 : i32
    %c2_i32_3 = arith.constant 2 : i32
    %7 = arith.addi %6, %c2_i32_3 : i32
    %c0_4 = arith.constant 0 : index
    %8 = arith.index_cast %7 : i32 to index
    %c0_5 = arith.constant 0 : index
    %c0_6 = arith.constant 0 : index
    %9 = vector.load %arg2[%c0_4, %8, %c0_5, %c0_6] : memref<1x18x9x256xbf16, #tpu.memory_space<vmem>>, vector<1x8x9x256xbf16>
    %10 = vector.shape_cast %9 : vector<1x8x9x256xbf16> to vector<8x9x256xbf16>
    %11 = vector.shape_cast %10 : vector<8x9x256xbf16> to vector<4x2x9x256xbf16>
    %12 = vector.extract_strided_slice %5 {offsets = [0, 0, 0, 0], sizes = [4, 1, 9, 256], strides = [1, 1, 1, 1]} : vector<4x2x9x256xbf16> to vector<4x1x9x256xbf16>
    %13 = vector.shape_cast %12 : vector<4x1x9x256xbf16> to vector<4x9x256xbf16>
    %14 = vector.extract_strided_slice %5 {offsets = [0, 1, 0, 0], sizes = [4, 1, 9, 256], strides = [1, 1, 1, 1]} : vector<4x2x9x256xbf16> to vector<4x1x9x256xbf16>
    %15 = vector.shape_cast %14 : vector<4x1x9x256xbf16> to vector<4x9x256xbf16>
    %16 = vector.extract_strided_slice %11 {offsets = [0, 0, 0, 0], sizes = [4, 1, 9, 256], strides = [1, 1, 1, 1]} : vector<4x2x9x256xbf16> to vector<4x1x9x256xbf16>
    %17 = vector.shape_cast %16 : vector<4x1x9x256xbf16> to vector<4x9x256xbf16>
    %18 = vector.extract_strided_slice %13 {offsets = [0, 0, 0], sizes = [4, 8, 256], strides = [1, 1, 1]} : vector<4x9x256xbf16> to vector<4x8x256xbf16>
    %19 = vector.extract_strided_slice %13 {offsets = [0, 1, 0], sizes = [4, 8, 128], strides = [1, 1, 1]} : vector<4x9x256xbf16> to vector<4x8x128xbf16>
    %20 = tpu.concatenate %18, %19 in 2 : vector<4x8x256xbf16>, vector<4x8x128xbf16> -> vector<4x8x384xbf16>
    %21 = vector.shape_cast %20 : vector<4x8x384xbf16> to vector<32x384xbf16>
    %c0_7 = arith.constant 0 : index
    %c0_8 = arith.constant 0 : index
    %c0_9 = arith.constant 0 : index
    %22 = vector.load %arg3[%c0_7, %c0_8, %c0_9] : memref<3x384x128xbf16, #tpu.memory_space<vmem>>, vector<1x384x128xbf16>
    %23 = vector.shape_cast %22 : vector<1x384x128xbf16> to vector<384x128xbf16>
    %cst = arith.constant dense<0.000000e+00> : vector<32x128xf32>
    %24 = tpu.matmul %21, %23, %cst {dimension_numbers = #tpu.dot_dimension_numbers<[1], [0], [0], [1], [0, 0, 1, 1], [], []>} : vector<32x384xbf16>, vector<384x128xbf16>, vector<32x128xf32> -> vector<32x128xf32>
    %25 = vector.extract_strided_slice %15 {offsets = [0, 0, 0], sizes = [4, 8, 256], strides = [1, 1, 1]} : vector<4x9x256xbf16> to vector<4x8x256xbf16>
    %26 = vector.extract_strided_slice %15 {offsets = [0, 1, 0], sizes = [4, 8, 128], strides = [1, 1, 1]} : vector<4x9x256xbf16> to vector<4x8x128xbf16>
    %27 = tpu.concatenate %25, %26 in 2 : vector<4x8x256xbf16>, vector<4x8x128xbf16> -> vector<4x8x384xbf16>
    %28 = vector.shape_cast %27 : vector<4x8x384xbf16> to vector<32x384xbf16>
    %c1 = arith.constant 1 : index
    %c0_10 = arith.constant 0 : index
    %c0_11 = arith.constant 0 : index
    %29 = vector.load %arg3[%c1, %c0_10, %c0_11] : memref<3x384x128xbf16, #tpu.memory_space<vmem>>, vector<1x384x128xbf16>
    %30 = vector.shape_cast %29 : vector<1x384x128xbf16> to vector<384x128xbf16>
    %cst_12 = arith.constant dense<0.000000e+00> : vector<32x128xf32>
    %31 = tpu.matmul %28, %30, %cst_12 {dimension_numbers = #tpu.dot_dimension_numbers<[1], [0], [0], [1], [0, 0, 1, 1], [], []>} : vector<32x384xbf16>, vector<384x128xbf16>, vector<32x128xf32> -> vector<32x128xf32>
    %32 = arith.addf %24, %31 : vector<32x128xf32>
    %33 = vector.extract_strided_slice %17 {offsets = [0, 0, 0], sizes = [4, 8, 256], strides = [1, 1, 1]} : vector<4x9x256xbf16> to vector<4x8x256xbf16>
    %34 = vector.extract_strided_slice %17 {offsets = [0, 1, 0], sizes = [4, 8, 128], strides = [1, 1, 1]} : vector<4x9x256xbf16> to vector<4x8x128xbf16>
    %35 = tpu.concatenate %33, %34 in 2 : vector<4x8x256xbf16>, vector<4x8x128xbf16> -> vector<4x8x384xbf16>
    %36 = vector.shape_cast %35 : vector<4x8x384xbf16> to vector<32x384xbf16>
    %c2 = arith.constant 2 : index
    %c0_13 = arith.constant 0 : index
    %c0_14 = arith.constant 0 : index
    %37 = vector.load %arg3[%c2, %c0_13, %c0_14] : memref<3x384x128xbf16, #tpu.memory_space<vmem>>, vector<1x384x128xbf16>
    %38 = vector.shape_cast %37 : vector<1x384x128xbf16> to vector<384x128xbf16>
    %cst_15 = arith.constant dense<0.000000e+00> : vector<32x128xf32>
    %39 = tpu.matmul %36, %38, %cst_15 {dimension_numbers = #tpu.dot_dimension_numbers<[1], [0], [0], [1], [0, 0, 1, 1], [], []>} : vector<32x384xbf16>, vector<384x128xbf16>, vector<32x128xf32> -> vector<32x128xf32>
    %40 = arith.addf %32, %39 : vector<32x128xf32>
    %c0_16 = arith.constant 0 : index
    %c0_17 = arith.constant 0 : index
    %41 = vector.load %arg4[%c0_16, %c0_17] : memref<1x128xf32, #tpu.memory_space<vmem>>, vector<1x128xf32>
    %42 = vector.broadcast %41 : vector<1x128xf32> to vector<32x128xf32>
    %43 = arith.mulf %40, %42 : vector<32x128xf32>
    %c0_18 = arith.constant 0 : index
    %c0_19 = arith.constant 0 : index
    %44 = vector.load %arg5[%c0_18, %c0_19] : memref<1x128xf32, #tpu.memory_space<vmem>>, vector<1x128xf32>
    %45 = vector.broadcast %44 : vector<1x128xf32> to vector<32x128xf32>
    %46 = arith.addf %43, %45 : vector<32x128xf32>
    %cst_20 = arith.constant 0.000000e+00 : f32
    %47 = vector.broadcast %cst_20 : f32 to vector<32x128xf32>
    %48 = arith.maximumf %46, %47 : vector<32x128xf32>
    %49 = arith.truncf %48 : vector<32x128xf32> to vector<32x128xbf16>
    %c0_21 = arith.constant 0 : index
    %c0_22 = arith.constant 0 : index
    %c0_23 = arith.constant 0 : index
    %50 = vector.load %arg6[%c0_21, %c0_22, %c0_23] : memref<1x32x128xbf16, #tpu.memory_space<vmem>>, vector<1x32x128xbf16>
    %51 = vector.shape_cast %50 : vector<1x32x128xbf16> to vector<32x128xbf16>
    %52 = vector.shape_cast %49 : vector<32x128xbf16> to vector<1x32x128xbf16>
    tpu.vector_store %arg6[%c0_21, %c0_22, %c0_23], %52 {strides = array<i32>} : memref<1x32x128xbf16, #tpu.memory_space<vmem>>, vector<1x32x128xbf16>,
    %53 = vector.shape_cast %48 : vector<32x128xf32> to vector<4x8x128xf32>
    %cst_24 = arith.constant dense<0xFF800000> : vector<8x128xf32>
    %54 = vector.multi_reduction <maximumf>, %53, %cst_24 [0] : vector<4x8x128xf32> to vector<8x128xf32>
    %c0_25 = arith.constant 0 : index
    %c0_26 = arith.constant 0 : index
    %c0_27 = arith.constant 0 : index
    %55 = vector.load %arg7[%c0_25, %c0_26, %c0_27] : memref<1x8x128xf32, #tpu.memory_space<vmem>>, vector<1x8x128xf32>
    %56 = vector.shape_cast %55 : vector<1x8x128xf32> to vector<8x128xf32>
    %57 = vector.shape_cast %54 : vector<8x128xf32> to vector<1x8x128xf32>
    tpu.vector_store %arg7[%c0_25, %c0_26, %c0_27], %57 {strides = array<i32>} : memref<1x8x128xf32, #tpu.memory_space<vmem>>, vector<1x8x128xf32>,
    return
  }
  func.func @transform_0(%arg0: i32, %arg1: i32) -> (i32, i32, i32, i32) {
    %c0_i32 = arith.constant 0 : i32
    %c0_i32_0 = arith.constant 0 : i32
    %c0_i32_1 = arith.constant 0 : i32
    %c0_i32_2 = arith.constant 0 : i32
    return %arg0, %c0_i32, %c0_i32_0, %c0_i32_1 : i32, i32, i32, i32
  }
  func.func @transform_1(%arg0: i32, %arg1: i32) -> (i32, i32, i32) {
    %c0_i32 = arith.constant 0 : i32
    %c0_i32_0 = arith.constant 0 : i32
    %c0_i32_1 = arith.constant 0 : i32
    %c0_i32_2 = arith.constant 0 : i32
    return %c0_i32, %c0_i32_0, %c0_i32_1 : i32, i32, i32
  }
  func.func @transform_2(%arg0: i32, %arg1: i32) -> (i32, i32) {
    %c0_i32 = arith.constant 0 : i32
    %c0_i32_0 = arith.constant 0 : i32
    %c0_i32_1 = arith.constant 0 : i32
    return %c0_i32, %c0_i32_0 : i32, i32
  }
  func.func @transform_3(%arg0: i32, %arg1: i32) -> (i32, i32) {
    %c0_i32 = arith.constant 0 : i32
    %c0_i32_0 = arith.constant 0 : i32
    %c0_i32_1 = arith.constant 0 : i32
    return %c0_i32, %c0_i32_0 : i32, i32
  }
  func.func @transform_4(%arg0: i32, %arg1: i32) -> (i32, i32, i32) {
    %c0_i32 = arith.constant 0 : i32
    %c0_i32_0 = arith.constant 0 : i32
    return %arg0, %arg1, %c0_i32 : i32, i32, i32
  }
  func.func @transform_5(%arg0: i32, %arg1: i32) -> (i32, i32, i32) {
    %c0_i32 = arith.constant 0 : i32
    %c0_i32_0 = arith.constant 0 : i32
    return %arg0, %arg1, %c0_i32 : i32, i32, i32
  }
}

module attributes {stable_mosaic.version = 11 : i64} {
  func.func @kernel(%arg0: i32, %arg1: i32, %arg2: memref<1x64x32xf32, #tpu.memory_space<vmem>>, %arg3: memref<1x64x128xbf16, #tpu.memory_space<vmem>>, %arg4: memref<1x1x32xf32, #tpu.memory_space<vmem>>, %arg5: memref<1x64x32xf32, #tpu.memory_space<vmem>>) attributes {dimension_semantics = [#tpu.dimension_semantics<parallel>, #tpu.dimension_semantics<parallel>], iteration_bounds = array<i64: 2, 1>, scalar_prefetch = 0 : i64, scratch_operands = 0 : i64, tpu.core_type = #tpu.core_type<tc>, window_params = [{transform_indices = @transform_0, window_bounds = array<i64: 1, 64, 32>}, {transform_indices = @transform_1, window_bounds = array<i64: 1, 64, 128>}, {transform_indices = @transform_2, window_bounds = array<i64: 1, 1, 32>}, {transform_indices = @transform_3, window_bounds = array<i64: 1, 64, 32>}]} {
    %c0 = arith.constant 0 : index
    %c0_0 = arith.constant 0 : index
    %c0_1 = arith.constant 0 : index
    %0 = vector.load %arg3[%c0, %c0_0, %c0_1] : memref<1x64x128xbf16, #tpu.memory_space<vmem>>, vector<1x64x128xbf16>
    %1 = vector.shape_cast %0 : vector<1x64x128xbf16> to vector<64x128xbf16>
    %2 = arith.extf %1 : vector<64x128xbf16> to vector<64x128xf32>
    %3 = vector.extract_strided_slice %2 {offsets = [0, 0], sizes = [64, 32], strides = [1, 1]} : vector<64x128xf32> to vector<64x32xf32>
    %c0_2 = arith.constant 0 : index
    %c0_3 = arith.constant 0 : index
    %c0_4 = arith.constant 0 : index
    %4 = vector.load %arg2[%c0_2, %c0_3, %c0_4] : memref<1x64x32xf32, #tpu.memory_space<vmem>>, vector<1x64x32xf32>
    %5 = vector.shape_cast %4 : vector<1x64x32xf32> to vector<64x32xf32>
    %c0_5 = arith.constant 0 : index
    %c0_6 = arith.constant 0 : index
    %c0_7 = arith.constant 0 : index
    %6 = vector.load %arg4[%c0_5, %c0_6, %c0_7] : memref<1x1x32xf32, #tpu.memory_space<vmem>>, vector<1x1x32xf32>
    %7 = vector.shape_cast %6 : vector<1x1x32xf32> to vector<1x32xf32>
    %8 = vector.broadcast %7 : vector<1x32xf32> to vector<64x32xf32>
    %9 = arith.mulf %3, %8 : vector<64x32xf32>
    %10 = arith.addf %5, %9 : vector<64x32xf32>
    %c0_8 = arith.constant 0 : index
    %c0_9 = arith.constant 0 : index
    %c0_10 = arith.constant 0 : index
    %11 = vector.load %arg5[%c0_8, %c0_9, %c0_10] : memref<1x64x32xf32, #tpu.memory_space<vmem>>, vector<1x64x32xf32>
    %12 = vector.shape_cast %11 : vector<1x64x32xf32> to vector<64x32xf32>
    %13 = vector.shape_cast %10 : vector<64x32xf32> to vector<1x64x32xf32>
    tpu.vector_store %arg5[%c0_8, %c0_9, %c0_10], %13 {strides = array<i32>} : memref<1x64x32xf32, #tpu.memory_space<vmem>>, vector<1x64x32xf32>,
    return
  }
  func.func @transform_0(%arg0: i32, %arg1: i32) -> (i32, i32, i32) {
    %c0_i32 = arith.constant 0 : i32
    %c0_i32_0 = arith.constant 0 : i32
    return %arg0, %arg1, %c0_i32 : i32, i32, i32
  }
  func.func @transform_1(%arg0: i32, %arg1: i32) -> (i32, i32, i32) {
    %c0_i32 = arith.constant 0 : i32
    %c0_i32_0 = arith.constant 0 : i32
    return %arg0, %arg1, %c0_i32 : i32, i32, i32
  }
  func.func @transform_2(%arg0: i32, %arg1: i32) -> (i32, i32, i32) {
    %c0_i32 = arith.constant 0 : i32
    %c0_i32_0 = arith.constant 0 : i32
    %c0_i32_1 = arith.constant 0 : i32
    return %arg0, %c0_i32, %c0_i32_0 : i32, i32, i32
  }
  func.func @transform_3(%arg0: i32, %arg1: i32) -> (i32, i32, i32) {
    %c0_i32 = arith.constant 0 : i32
    %c0_i32_0 = arith.constant 0 : i32
    return %arg0, %arg1, %c0_i32 : i32, i32, i32
  }
}

</mosaic_0001>

<llo_original>
// kernel: _lambda_.3
$region0: #{_lambda_.3}
  #allocation0 [shape = 'u32[]', space=smem, size = 0x4, offset = 0x4, fixed_abs, tag = 'smem constant byte address 0x4 - core index']
  #allocation1 [shape = 'u32[144,128]{1,0:T(1,128)}', space=vmem, size = 0x12000, scoped, tag = 'internal scratch']
  %s0 = inlined_call_operand.vmem [shape: bf16[2,18,18,16], index: 0, kind: input, shape index: {}]
  %s1 = inlined_call_operand.vmem [shape: bf16[3,48,128], index: 1, kind: input, shape index: {}]
  %s2 = inlined_call_operand.vmem [shape: f32[1,128], index: 2, kind: input, shape index: {}]
  %s3 = inlined_call_operand.vmem [shape: f32[1,128], index: 3, kind: input, shape index: {}]
  %s4 = inlined_call_operand.vmem [shape: bf16[2,256,128], index: 4, kind: output, shape index: {}]
  %s5 = sld [smem:[#allocation0]]
  $region49: #{_lambda_.3} parent=0
    _
  %s7 = ssub.s32 1, %s5
  %s8 = scalar_select 0, %s7, %s5
  loop: start=0, step=1, limit=18
  $region2: #{_lambda_.3} parent=0 // loop_pre_header
    _
  $region3: #{_lambda_.3} parent=0 // loop_header
    %s10 = sphi 0, %s14
    %p11 = scmp.ge.s32.totalorder %s10, 18
    %s17 = sphi 0, %s29
    %s18 = sphi 0, %s25
    %s19 = sphi 0, %s17
    %s20 = sphi 0, %s18
    %s21 = sphi 0, %s19
    %s22 = sphi 0, %s20
    %s32 = sphi 0, %s34
    %s35 = sphi 0, %s32
    %s36 = sphi 0, %s35
    %s52 = sphi 0, %s36
    %s56 = sphi 0, %s56
    %s58 = sphi 0, %s56
    %s59 = sphi 0, %s58
    %s73 = sphi 0, %s59
    %s77 = sphi 0, %s77
    %s79 = sphi 0, %s77
    %s80 = sphi 0, %s79
    %s94 = sphi 0, %s80
    %s98 = sphi 0, %s98
    %s100 = sphi 0, %s98
    %s101 = sphi 0, %s100
    %s115 = sphi 0, %s101
    %s123 = sphi 0, %s125
    %s126 = sphi 0, %s123
    %s127 = sphi 0, %s126
    %s143 = sphi 0, %s127
  $region4: #{_lambda_.3} parent=0 // loop_header_branch
    %13 = sbr.rel (%p11) target = $region8
  $region5: #{_lambda_.3} parent=0 // loop_body
    %s15 = ssub.s32 %s10, 1
    %s16 = ssub.s32 %s10, 2
    %s23 = sadd.s32 1, %s18
    %p24 = scmp.ge.s32.totalorder %s23, 8
    %s25 = scalar_select %p24, 0, %s23
    %s26 = sadd.s32 1, %s17
    %s27 = scalar_select %p24, %s26, %s17
    %p28 = scmp.ge.s32.totalorder %s27, 2
    %s29 = scalar_select %p28, 0, %s27
    %s30 = ssub.s32 %s17, %s29
    %p31 = scmp.eq.s32.totalorder %s30, 0
    %s33 = sadd.s32 %s32, 1
    %s34 = scalar_select %p31, %s32, %s33
    %p37 = pneg %p31
    %p38 = scmp.eq.s32.totalorder %s10, 15
    %p39 = por %p37, %p38
    %p40 = scmp.ne.s32.totalorder %s32, %s35
    %p41 = scmp.eq.s32.totalorder %s10, 0
    %p42 = por %p40, %p41
    %p43 = scmp.ne.s32.totalorder %s32, %s35
    %p44 = scmp.eq.s32.totalorder %s15, 15
    %p45 = por %p43, %p44
    %p46 = scmp.ne.s32.totalorder %s35, %s36
    %p47 = scmp.eq.s32.totalorder %s15, 0
    %p48 = por %p46, %p47
    %p49 = scmp.ne.s32.totalorder %s35, %s36
    %p50 = scmp.eq.s32.totalorder %s16, 15
    %p51 = por %p49, %p50
    %p53 = scmp.ne.s32.totalorder %s36, %s52
    %p54 = scmp.eq.s32.totalorder %s16, 0
    %p55 = por %p53, %p54
    %s57 = sadd.s32 %s56, 1
    %p60 = scmp.eq.s32.totalorder %s10, 15
    %p61 = scmp.ne.s32.totalorder %s56, %s58
    %p62 = scmp.eq.s32.totalorder %s10, 0
    %p63 = por %p61, %p62
    %p64 = scmp.ne.s32.totalorder %s56, %s58
    %p65 = scmp.eq.s32.totalorder %s15, 15
    %p66 = por %p64, %p65
    %p67 = scmp.ne.s32.totalorder %s58, %s59
    %p68 = scmp.eq.s32.totalorder %s15, 0
    %p69 = por %p67, %p68
    %p70 = scmp.ne.s32.totalorder %s58, %s59
    %p71 = scmp.eq.s32.totalorder %s16, 15
    %p72 = por %p70, %p71
    %p74 = scmp.ne.s32.totalorder %s59, %s73
    %p75 = scmp.eq.s32.totalorder %s16, 0
    %p76 = por %p74, %p75
    %s78 = sadd.s32 %s77, 1
    %p81 = scmp.eq.s32.totalorder %s10, 15
    %p82 = scmp.ne.s32.totalorder %s77, %s79
    %p83 = scmp.eq.s32.totalorder %s10, 0
    %p84 = por %p82, %p83
    %p85 = scmp.ne.s32.totalorder %s77, %s79
    %p86 = scmp.eq.s32.totalorder %s15, 15
    %p87 = por %p85, %p86
    %p88 = scmp.ne.s32.totalorder %s79, %s80
    %p89 = scmp.eq.s32.totalorder %s15, 0
    %p90 = por %p88, %p89
    %p91 = scmp.ne.s32.totalorder %s79, %s80
    %p92 = scmp.eq.s32.totalorder %s16, 15
    %p93 = por %p91, %p92
    %p95 = scmp.ne.s32.totalorder %s80, %s94
    %p96 = scmp.eq.s32.totalorder %s16, 0
    %p97 = por %p95, %p96
    %s99 = sadd.s32 %s98, 1
    %p102 = scmp.eq.s32.totalorder %s10, 15
    %p103 = scmp.ne.s32.totalorder %s98, %s100
    %p104 = scmp.eq.s32.totalorder %s10, 0
    %p105 = por %p103, %p104
    %p106 = scmp.ne.s32.totalorder %s98, %s100
    %p107 = scmp.eq.s32.totalorder %s15, 15
    %p108 = por %p106, %p107
    %p109 = scmp.ne.s32.totalorder %s100, %s101
    %p110 = scmp.eq.s32.totalorder %s15, 0
    %p111 = por %p109, %p110
    %p112 = scmp.ne.s32.totalorder %s100, %s101
    %p113 = scmp.eq.s32.totalorder %s16, 15
    %p114 = por %p112, %p113
    %p116 = scmp.ne.s32.totalorder %s101, %s115
    %p117 = scmp.eq.s32.totalorder %s16, 0
    %p118 = por %p116, %p117
    %s119 = ssub.s32 %s17, %s29
    %s120 = ssub.s32 %s18, %s25
    %s121 = sor.u32 %s119, %s120
    %p122 = scmp.eq.s32.totalorder %s121, 0
    %s124 = sadd.s32 %s123, 1
    %s125 = scalar_select %p122, %s123, %s124
    %p128 = pneg %p122
    %p129 = scmp.eq.s32.totalorder %s10, 15
    %p130 = por %p128, %p129
    %p131 = scmp.ne.s32.totalorder %s123, %s126
    %p132 = scmp.eq.s32.totalorder %s10, 0
    %p133 = por %p131, %p132
    %p134 = scmp.ne.s32.totalorder %s123, %s126
    %p135 = scmp.eq.s32.totalorder %s15, 15
    %p136 = por %p134, %p135
    %p137 = scmp.ne.s32.totalorder %s126, %s127
    %p138 = scmp.eq.s32.totalorder %s15, 0
    %p139 = por %p137, %p138
    %p140 = scmp.ne.s32.totalorder %s126, %s127
    %p141 = scmp.eq.s32.totalorder %s16, 15
    %p142 = por %p140, %p141
    %p144 = scmp.ne.s32.totalorder %s127, %s143
    %p145 = scmp.eq.s32.totalorder %s16, 0
    %p146 = por %p144, %p145
    %p147 = scmp.le.s32.totalorder 1, %s10
    %p148 = scmp.lt.s32.totalorder %s10, 17
    %p149 = pnand %p147, %p148
    %p150 = pneg %p149
    // Predicated region
    $region9: #{_lambda_.3} parent=5 // pred_check
      _
    $region10: #{_lambda_.3} parent=5 // pred_check_branch
      %152 = sbr.rel (%p149) target = $region12
    $region11: #{_lambda_.3} parent=5 // pred_region
      %s153 = ssub.s32 %s10, 1
      // Predicated region
      $region13: #{_lambda_.3} parent=11 // pred_check
        %p154 = pneg %p69
      $region14: #{_lambda_.3} parent=11 // pred_check_branch
        %156 = sbr.rel (%p154) target = $region16
      $region15: #{_lambda_.3} parent=11 // pred_region
        _
      $region16: #{_lambda_.3} parent=11 // pred_fallthru
        _
      // Predicated region
      $region17: #{_lambda_.3} parent=11 // pred_check
        %p157 = pneg %p90
      $region18: #{_lambda_.3} parent=11 // pred_check_branch
        %159 = sbr.rel (%p157) target = $region20
      $region19: #{_lambda_.3} parent=11 // pred_region
        _
      $region20: #{_lambda_.3} parent=11 // pred_fallthru
        _
      // Predicated region
      $region21: #{_lambda_.3} parent=11 // pred_check
        %p160 = pneg %p111
      $region22: #{_lambda_.3} parent=11 // pred_check_branch
        %162 = sbr.rel (%p160) target = $region24
      $region23: #{_lambda_.3} parent=11 // pred_region
        _
      $region24: #{_lambda_.3} parent=11 // pred_fallthru
        _
    $region12: #{_lambda_.3} parent=5 // pred_fallthru
      _
    %p163 = scmp.lt.s32.totalorder %s10, 16
    // Predicated region
    $region25: #{_lambda_.3} parent=5 // pred_check
      %p164 = pneg %p163
    $region26: #{_lambda_.3} parent=5 // pred_check_branch
      %166 = sbr.rel (%p164) target = $region28
    $region27: #{_lambda_.3} parent=5 // pred_region
      // Predicated region
      $region29: #{_lambda_.3} parent=27 // pred_check
        %p167 = pneg %p42
      $region30: #{_lambda_.3} parent=27 // pred_check_branch
        %169 = sbr.rel (%p167) target = $region32
      $region31: #{_lambda_.3} parent=27 // pred_region
        %p170 = scmp.lt.s32.totalorder %s17, 1
        %s171 = scalar_select %p170, %s17, 1
        %s172 = smul.addr %s171, 54
        %s173 = smul.addr %s172, 4
        %s174 = scalar_lea.vmem %s0, %s173
      $region32: #{_lambda_.3} parent=27 // pred_fallthru
        _
    $region28: #{_lambda_.3} parent=5 // pred_fallthru
      _
    %p175 = scmp.le.s32.totalorder 1, %s10
    %p176 = scmp.lt.s32.totalorder %s10, 17
    %p177 = pnand %p175, %p176
    %p178 = pneg %p177
    // Predicated region
    $region33: #{_lambda_.3} parent=5 // pred_check
      _
    $region34: #{_lambda_.3} parent=5 // pred_check_branch
      %180 = sbr.rel (%p177) target = $region36
    $region35: #{_lambda_.3} parent=5 // pred_region
      %s181 = ssub.s32 %s10, 1
      %p182 = scmp.lt.s32.totalorder %s19, 1
      %s183 = scalar_select %p182, %s19, 1
      %s184 = smul.addr %s183, 54
      %s185 = smul.addr %s184, 4
      %s186 = scalar_lea.vmem %s0, %s185
      %p187 = pneg %p48
      %p188 = pneg %p45
      %p189 = pneg %p69
      %p190 = pneg %p66
      %p191 = pneg %p90
      %p192 = pneg %p87
      %p193 = pneg %p111
      %p194 = pneg %p108
      %p195 = pneg %p139
      %p196 = pneg %p136
      %s197 = smul.u32 4, %s20
      %p198 = scmp.lt.s32.totalorder %s19, 1
      %s199 = scalar_select %p198, %s19, 1
      %p200 = scmp.lt.s32.totalorder %s197, 31
      %s201 = scalar_select %p200, %s197, 31
      %s202 = smul.addr %s199, 32
      %s203 = sadd.s32 %s201, %s202
      %s204 = smul.addr %s203, 4
      %s205 = scalar_lea.vmem %s4, %s204
      %p206 = scmp.lt.s32.totalorder %s19, 1
      %s207 = scalar_select %p206, %s19, 1
      %s208 = smul.addr %s207, 54
      %s209 = smul.addr %s208, 4
      %s210 = scalar_lea.vmem %s0, %s209
      %s211 = smul.u32 4, %s20
      %p212 = scmp.lt.s32.totalorder %s19, 1
      %s213 = scalar_select %p212, %s19, 1
      %p214 = scmp.lt.s32.totalorder %s211, 31
      %s215 = scalar_select %p214, %s211, 31
      %s216 = smul.addr %s213, 32
      %s217 = sadd.s32 %s215, %s216
      %s218 = smul.addr %s217, 4
      %s219 = scalar_lea.vmem %s4, %s218
      %s220 = smul.u32 4, %s20
      %s222 = smul.u32 %s20, 2
      %s223 = smul.u32 %s222, 3
      %s224 = smul.addr %s223, 4
      %s225 = scalar_lea.vmem %s210, %s224
      %v226 = vld [vmem:[%s225] sm:$0xf]
      %v227 = vld [vmem:[%s225 + $0x4] sm:$0xf]
      %v228 = vld [vmem:[%s225 + $0x8] sm:$0x1]
      %v229 = vld [vmem:[%s225 + $0xc] sm:$0xf]
      %v230 = vld [vmem:[%s225 + $0x10] sm:$0xf]
      %v231 = vld [vmem:[%s225 + $0x14] sm:$0x1]
      %s232 = sadd.s32 %s222, 1
      %s233 = smul.u32 %s232, 3
      %s234 = smul.addr %s233, 4
      %s235 = scalar_lea.vmem %s210, %s234
      %v236 = vld [vmem:[%s235] sm:$0xf]
      %v237 = vld [vmem:[%s235 + $0x4] sm:$0xf]
      %v238 = vld [vmem:[%s235 + $0x8] sm:$0x1]
      %v239 = vld [vmem:[%s235 + $0xc] sm:$0xf]
      %v240 = vld [vmem:[%s235 + $0x10] sm:$0xf]
      %v241 = vld [vmem:[%s235 + $0x14] sm:$0x1]
      %s242 = sadd.s32 %s222, 2
      %s243 = smul.u32 %s242, 3
      %s244 = smul.addr %s243, 4
      %s245 = scalar_lea.vmem %s210, %s244
      %v246 = vld [vmem:[%s245] sm:$0xf]
      %v247 = vld [vmem:[%s245 + $0x4] sm:$0xf]
      %v248 = vld [vmem:[%s245 + $0x8] sm:$0x1]
      %v249 = vld [vmem:[%s245 + $0xc] sm:$0xf]
      %v250 = vld [vmem:[%s245 + $0x10] sm:$0xf]
      %v251 = vld [vmem:[%s245 + $0x14] sm:$0x1]
      %v258 = vunpack.c.l.b16 %v226
      %v259 = vunpack.c.l.b16 %v227
      %v260 = vunpack.c.l.b16 %v228
      %v261 = vunpack.c.l.b16 %v229
      %v262 = vunpack.c.l.b16 %v230
      %v263 = vunpack.c.l.b16 %v231
      %v264 = vpack.c.b16 %v259, %v258
      %v265 = vpack.c.b16 %v260, %v260
      %v266 = vpack.c.b16 %v262, %v261
      %v267 = vpack.c.b16 %v263, %v263
      %v274 = vunpack.c.l.b16 %v236
      %v275 = vunpack.c.l.b16 %v237
      %v276 = vunpack.c.l.b16 %v238
      %v277 = vunpack.c.l.b16 %v239
      %v278 = vunpack.c.l.b16 %v240
      %v279 = vunpack.c.l.b16 %v241
      %v280 = vpack.c.b16 %v275, %v274
      %v281 = vpack.c.b16 %v276, %v276
      %v282 = vpack.c.b16 %v278, %v277
      %v283 = vpack.c.b16 %v279, %v279
      %284 = vrot.lane.b32.xlu0 %v280, 16
      %v285 = vpop.permute.xlu0 %284
      %286 = vrot.lane.b32.xlu0 %v281, 16
      %v287 = vpop.permute.xlu0 %286
      %288 = vrot.lane.b32.xlu0 %v282, 16
      %v289 = vpop.permute.xlu0 %288
      %290 = vrot.lane.b32.xlu0 %v283, 16
      %v291 = vpop.permute.xlu0 %290
      %v298 = vunpack.c.l.b16 %v246
      %v299 = vunpack.c.l.b16 %v247
      %v300 = vunpack.c.l.b16 %v248
      %v301 = vunpack.c.l.b16 %v249
      %v302 = vunpack.c.l.b16 %v250
      %v303 = vunpack.c.l.b16 %v251
      %v304 = vpack.c.b16 %v299, %v298
      %v305 = vpack.c.b16 %v300, %v300
      %v306 = vpack.c.b16 %v302, %v301
      %v307 = vpack.c.b16 %v303, %v303
      %308 = vrot.lane.b32.xlu0 %v304, 32
      %v309 = vpop.permute.xlu0 %308
      %310 = vrot.lane.b32.xlu0 %v305, 32
      %v311 = vpop.permute.xlu0 %310
      %312 = vrot.lane.b32.xlu0 %v306, 32
      %v313 = vpop.permute.xlu0 %312
      %314 = vrot.lane.b32.xlu0 %v307, 32
      %v315 = vpop.permute.xlu0 %314
      %vm316 = vcmask 130048
      %v319 = vsel %vm316, %v264, %v285
      %v322 = vsel %vm316, %v265, %v287
      %v325 = vsel %vm316, %v266, %v289
      %v328 = vsel %vm316, %v267, %v291
      %vm329 = vcmask 261120
      %v331 = vsel %vm329, %v319, %v309
      %v333 = vsel %vm329, %v322, %v311
      %v335 = vsel %vm329, %v325, %v313
      %v337 = vsel %vm329, %v328, %v315
      %v338 = vld [vmem:[%s1] sm:$0xf]
      %v339 = vld [vmem:[%s1 + $0x4] sm:$0xf]
      %v340 = vld [vmem:[%s1 + $0x8] sm:$0xf]
      %v341 = vld [vmem:[%s1 + $0xc] sm:$0xf]
      %v342 = vld [vmem:[%s1 + $0x10] sm:$0xf]
      %v343 = vld [vmem:[%s1 + $0x14] sm:$0xf]
      %vm344 = vsmask.f32 7424
      %v345 = vshrl.u32 %v331, 16
      %v347 = vshll.u32 %v331, 16
      %v349 = vrot.slane %v347, 1
      %v350 = vor.u32 %v345, %v349
      %v351 = vshll.u32 %v333, 16
      %v353 = vrot.slane %v351, 1
      %v354 = vsel %vm344, %v350, %v353
      %v355 = vshrl.u32 %v335, 16
      %v357 = vshll.u32 %v335, 16
      %v359 = vrot.slane %v357, 1
      %v360 = vor.u32 %v355, %v359
      %v361 = vshll.u32 %v337, 16
      %v363 = vrot.slane %v361, 1
      %v364 = vsel %vm344, %v360, %v363
      %s365 = scalar_lea.vmem %s1, 24
      %v366 = vld [vmem:[%s365] sm:$0xf]
      %v367 = vld [vmem:[%s365 + $0x4] sm:$0xf]
      %v368 = vld [vmem:[%s365 + $0x8] sm:$0xf]
      %v369 = vld [vmem:[%s365 + $0xc] sm:$0xf]
      %v370 = vld [vmem:[%s365 + $0x10] sm:$0xf]
      %v371 = vld [vmem:[%s365 + $0x14] sm:$0xf]
      %v378 = vunpack.c.l.b16 %v366
      %v379 = vunpack.c.l.b16 %v367
      %v380 = vunpack.c.l.b16 %v368
      %v381 = vunpack.c.l.b16 %v369
      %v382 = vunpack.c.l.b16 %v370
      %v383 = vunpack.c.l.b16 %v371
      %v384 = vpack.c.b16 %v379, %v378
      %v385 = vpack.c.b16 %v381, %v380
      %v386 = vpack.c.b16 %v383, %v382
      %vm390 = vcmask 392192
      %v392 = vsel %vm390, %v354, 0
      %v395 = vsel %vm390, %v364, 0
      %397 = vmatprep.subr.bf16.mxu0 0
      %398 = vmatpush1.bf16.msra.mxu0 %v384
      %399 = vmatprep.subr.bf16.mxu0 0
      %400 = vmatpush1.bf16.msra.mxu0 %v385
      %401 = vmatprep.subr.bf16.mxu0 0
      %402 = vmatpush1.bf16.msra.mxu0 %v386
      %403 = vmatprep.subr.bf16.mxu0 0
      %404 = vmatpush1.bf16.msra.mxu0 0
      %405 = vmatprep.subr.bf16.mxu0 0
      %406 = vmatpush1.bf16.msra.mxu0 0
      %407 = vmatprep.subr.bf16.mxu0 0
      %408 = vmatpush1.bf16.msra.mxu0 0
      %409 = vmatprep.subr.bf16.mxu0 0
      %410 = vmatpush1.bf16.msra.mxu0 0
      %411 = vmatprep.subr.bf16.mxu0 0
      %412 = vmatpush1.bf16.msra.mxu0 0
      %413 = vmatprep.subr.bf16.mxu0 0
      %414 = vmatpush1.bf16.msra.mxu0 0
      %415 = vmatprep.subr.bf16.mxu0 0
      %416 = vmatpush1.bf16.msra.mxu0 0
      %417 = vmatprep.subr.bf16.mxu0 0
      %418 = vmatpush1.bf16.msra.mxu0 0
      %419 = vmatprep.subr.bf16.mxu0 0
      %420 = vmatpush1.bf16.msra.mxu0 0
      %421 = vmatprep.subr.bf16.mxu0 0
      %422 = vmatpush1.bf16.msra.mxu0 0
      %423 = vmatprep.subr.bf16.mxu0 0
      %424 = vmatpush1.bf16.msra.mxu0 0
      %425 = vmatprep.subr.bf16.mxu0 0
      %426 = vmatpush1.bf16.msra.mxu0 0
      %427 = vmatprep.subr.bf16.mxu0 0
      %428 = vmatpush1.bf16.msra.mxu0 0
      %429 = vmatprep.mubr.bf16.mxu0 0
      %430 = vmatmul.mubr.bf16.gmra.mrb[0].mxu0 %v392
      %v431 = vpop.f32.mrb[0].mxu0
      %v432 = vadd.f32 0.0, %v431
      %v433 = vpop.f32.mrb[0].mxu0
      %v434 = vpop.f32.mrb[0].mxu0
      %v435 = vadd.f32 0.0, %v434
      %v436 = vpop.f32.mrb[0].mxu0
      %437 = vmatprep.mubr.bf16.mxu0 0
      %438 = vmatmul.mubr.bf16.gmra.mrb[0].mxu0 %v395
      %v439 = vpop.f32.mrb[0].mxu0
      %v440 = vadd.f32 0.0, %v439
      %v441 = vpop.f32.mrb[0].mxu0
      %v442 = vpop.f32.mrb[0].mxu0
      %v443 = vadd.f32 0.0, %v442
      %v444 = vpop.f32.mrb[0].mxu0
      %445 = vdwg.mxu0
      %v452 = vunpack.c.l.b16 %v338
      %v453 = vunpack.c.l.b16 %v339
      %v454 = vunpack.c.l.b16 %v340
      %v455 = vunpack.c.l.b16 %v341
      %v456 = vunpack.c.l.b16 %v342
      %v457 = vunpack.c.l.b16 %v343
      %v458 = vpack.c.b16 %v453, %v452
      %v459 = vpack.c.b16 %v455, %v454
      %v460 = vpack.c.b16 %v457, %v456
      %v464 = vsel %vm390, %v331, 0
      %v466 = vsel %vm390, %v335, 0
      %468 = vmatprep.subr.bf16.mxu0 0
      %469 = vmatpush1.bf16.msra.mxu0 %v458
      %470 = vmatprep.subr.bf16.mxu0 0
      %471 = vmatpush1.bf16.msra.mxu0 %v459
      %472 = vmatprep.subr.bf16.mxu0 0
      %473 = vmatpush1.bf16.msra.mxu0 %v460
      %474 = vmatprep.subr.bf16.mxu0 0
      %475 = vmatpush1.bf16.msra.mxu0 0
      %476 = vmatprep.subr.bf16.mxu0 0
      %477 = vmatpush1.bf16.msra.mxu0 0
      %478 = vmatprep.subr.bf16.mxu0 0
      %479 = vmatpush1.bf16.msra.mxu0 0
      %480 = vmatprep.subr.bf16.mxu0 0
      %481 = vmatpush1.bf16.msra.mxu0 0
      %482 = vmatprep.subr.bf16.mxu0 0
      %483 = vmatpush1.bf16.msra.mxu0 0
      %484 = vmatprep.subr.bf16.mxu0 0
      %485 = vmatpush1.bf16.msra.mxu0 0
      %486 = vmatprep.subr.bf16.mxu0 0
      %487 = vmatpush1.bf16.msra.mxu0 0
      %488 = vmatprep.subr.bf16.mxu0 0
      %489 = vmatpush1.bf16.msra.mxu0 0
      %490 = vmatprep.subr.bf16.mxu0 0
      %491 = vmatpush1.bf16.msra.mxu0 0
      %492 = vmatprep.subr.bf16.mxu0 0
      %493 = vmatpush1.bf16.msra.mxu0 0
      %494 = vmatprep.subr.bf16.mxu0 0
      %495 = vmatpush1.bf16.msra.mxu0 0
      %496 = vmatprep.subr.bf16.mxu0 0
      %497 = vmatpush1.bf16.msra.mxu0 0
      %498 = vmatprep.subr.bf16.mxu0 0
      %499 = vmatpush1.bf16.msra.mxu0 0
      %500 = vmatprep.mubr.bf16.mxu0 0
      %501 = vmatmul.mubr.bf16.gmra.mrb[0].mxu0 %v464
      %v502 = vpop.f32.mrb[0].mxu0
      %v503 = vadd.f32 %v432, %v502
      %v504 = vpop.f32.mrb[0].mxu0
      %v505 = vpop.f32.mrb[0].mxu0
      %v506 = vadd.f32 %v435, %v505
      %v507 = vpop.f32.mrb[0].mxu0
      %508 = vmatprep.mubr.bf16.mxu0 0
      %509 = vmatmul.mubr.bf16.gmra.mrb[0].mxu0 %v466
      %v510 = vpop.f32.mrb[0].mxu0
      %v511 = vadd.f32 %v440, %v510
      %v512 = vpop.f32.mrb[0].mxu0
      %v513 = vpop.f32.mrb[0].mxu0
      %v514 = vadd.f32 %v443, %v513
      %v515 = vpop.f32.mrb[0].mxu0
      %516 = vdwg.mxu0
      %vm521 = vcmask 1046528
      %v522 = vrot.slane %v331, 1
      %v523 = vrot.slane %v333, 1
      %v524 = vsel %vm521, %v522, %v523
      %v525 = vrot.slane %v335, 1
      %v526 = vrot.slane %v337, 1
      %v527 = vsel %vm521, %v525, %v526
      %s528 = scalar_lea.vmem %s1, 48
      %v529 = vld [vmem:[%s528] sm:$0xf]
      %v530 = vld [vmem:[%s528 + $0x4] sm:$0xf]
      %v531 = vld [vmem:[%s528 + $0x8] sm:$0xf]
      %v532 = vld [vmem:[%s528 + $0xc] sm:$0xf]
      %v533 = vld [vmem:[%s528 + $0x10] sm:$0xf]
      %v534 = vld [vmem:[%s528 + $0x14] sm:$0xf]
      %v541 = vunpack.c.l.b16 %v529
      %v542 = vunpack.c.l.b16 %v530
      %v543 = vunpack.c.l.b16 %v531
      %v544 = vunpack.c.l.b16 %v532
      %v545 = vunpack.c.l.b16 %v533
      %v546 = vunpack.c.l.b16 %v534
      %v547 = vpack.c.b16 %v542, %v541
      %v548 = vpack.c.b16 %v544, %v543
      %v549 = vpack.c.b16 %v546, %v545
      %v554 = vsel %vm390, %v524, 0
      %v557 = vsel %vm390, %v527, 0
      %559 = vmatprep.subr.bf16.mxu0 0
      %560 = vmatpush1.bf16.msra.mxu0 %v547
      %561 = vmatprep.subr.bf16.mxu0 0
      %562 = vmatpush1.bf16.msra.mxu0 %v548
      %563 = vmatprep.subr.bf16.mxu0 0
      %564 = vmatpush1.bf16.msra.mxu0 %v549
      %565 = vmatprep.subr.bf16.mxu0 0
      %566 = vmatpush1.bf16.msra.mxu0 0
      %567 = vmatprep.subr.bf16.mxu0 0
      %568 = vmatpush1.bf16.msra.mxu0 0
      %569 = vmatprep.subr.bf16.mxu0 0
      %570 = vmatpush1.bf16.msra.mxu0 0
      %571 = vmatprep.subr.bf16.mxu0 0
      %572 = vmatpush1.bf16.msra.mxu0 0
      %573 = vmatprep.subr.bf16.mxu0 0
      %574 = vmatpush1.bf16.msra.mxu0 0
      %575 = vmatprep.subr.bf16.mxu0 0
      %576 = vmatpush1.bf16.msra.mxu0 0
      %577 = vmatprep.subr.bf16.mxu0 0
      %578 = vmatpush1.bf16.msra.mxu0 0
      %579 = vmatprep.subr.bf16.mxu0 0
      %580 = vmatpush1.bf16.msra.mxu0 0
      %581 = vmatprep.subr.bf16.mxu0 0
      %582 = vmatpush1.bf16.msra.mxu0 0
      %583 = vmatprep.subr.bf16.mxu0 0
      %584 = vmatpush1.bf16.msra.mxu0 0
      %585 = vmatprep.subr.bf16.mxu0 0
      %586 = vmatpush1.bf16.msra.mxu0 0
      %587 = vmatprep.subr.bf16.mxu0 0
      %588 = vmatpush1.bf16.msra.mxu0 0
      %589 = vmatprep.subr.bf16.mxu0 0
      %590 = vmatpush1.bf16.msra.mxu0 0
      %591 = vmatprep.mubr.bf16.mxu0 0
      %592 = vmatmul.mubr.bf16.gmra.mrb[0].mxu0 %v554
      %v593 = vpop.f32.mrb[0].mxu0
      %v594 = vadd.f32 0.0, %v593
      %v595 = vpop.f32.mrb[0].mxu0
      %v596 = vpop.f32.mrb[0].mxu0
      %v597 = vadd.f32 0.0, %v596
      %v598 = vpop.f32.mrb[0].mxu0
      %599 = vmatprep.mubr.bf16.mxu0 0
      %600 = vmatmul.mubr.bf16.gmra.mrb[0].mxu0 %v557
      %v601 = vpop.f32.mrb[0].mxu0
      %v602 = vadd.f32 0.0, %v601
      %v603 = vpop.f32.mrb[0].mxu0
      %v604 = vpop.f32.mrb[0].mxu0
      %v605 = vadd.f32 0.0, %v604
      %v606 = vpop.f32.mrb[0].mxu0
      %607 = vdwg.mxu0
      %v608 = vadd.f32 %v503, %v594
      %v609 = vadd.f32 %v506, %v597
      %v610 = vadd.f32 %v511, %v602
      %v611 = vadd.f32 %v514, %v605
      %v612 = vld [vmem:[%s2] sm:$0x1]
      %v614 = vlaneseq
      %v615 = vshrl.u32 %v614, 7
      %v616 = vsub.s32 0, %v615
      %v617 = vrot.slane %v612, %v616
      %v619 = vmul.f32 %v608, %v617
      %v620 = vmul.f32 %v609, %v617
      %v621 = vmul.f32 %v610, %v617
      %v622 = vmul.f32 %v611, %v617
      %v623 = vld [vmem:[%s3] sm:$0x1]
      %v625 = vlaneseq
      %v626 = vshrl.u32 %v625, 7
      %v627 = vsub.s32 0, %v626
      %v628 = vrot.slane %v623, %v627
      %v630 = vadd.f32 %v619, %v628
      %v631 = vadd.f32 %v620, %v628
      %v632 = vadd.f32 %v621, %v628
      %v633 = vadd.f32 %v622, %v628
      %v634 = vmax.f32 %v630, 0.0
      %v635 = vmax.f32 %v631, 0.0
      %v636 = vmax.f32 %v632, 0.0
      %v637 = vmax.f32 %v633, 0.0
      %v638 = vpack.c.bf16 %v635, %v634
      %v639 = vpack.c.bf16 %v637, %v636
      %v642 = vunpack.c.l.b16 %v638
      %v643 = vunpack.c.h.b16 %v638
      %v644 = vunpack.c.l.b16 %v639
      %v645 = vunpack.c.h.b16 %v639
      %v646 = vpack.c.b16 %v642, %v642
      %v647 = vpack.c.b16 %v643, %v643
      %v648 = vpack.c.b16 %v644, %v644
      %v649 = vpack.c.b16 %v645, %v645
      %654 = vst [vmem:[%s219] sm:$0xf] %v646
      %655 = vst [vmem:[%s219 + $0x4] sm:$0xf] %v647
      %656 = vst [vmem:[%s219 + $0x8] sm:$0xf] %v648
      %657 = vst [vmem:[%s219 + $0xc] sm:$0xf] %v649
      %s658 = smul.u32 4, %s20
      %p659 = scmp.lt.s32.totalorder %s19, 1
      %s660 = scalar_select %p659, %s19, 1
      %p661 = scmp.lt.s32.totalorder %s658, 31
      %s662 = scalar_select %p661, %s658, 31
      %s663 = smul.addr %s660, 32
      %s664 = sadd.s32 %s662, %s663
      %s665 = smul.addr %s664, 4
      %s666 = scalar_lea.vmem %s4, %s665
      // Predicated region
      $region37: #{_lambda_.3} parent=35 // pred_check
        %p667 = pneg %p136
      $region38: #{_lambda_.3} parent=35 // pred_check_branch
        %669 = sbr.rel (%p667) target = $region40
      $region39: #{_lambda_.3} parent=35 // pred_region
        %s670 = smul.u32 4, %s20
      $region40: #{_lambda_.3} parent=35 // pred_fallthru
        _
    $region36: #{_lambda_.3} parent=5 // pred_fallthru
      _
    %p671 = scmp.le.s32.totalorder 2, %s10
    // Predicated region
    $region41: #{_lambda_.3} parent=5 // pred_check
      %p672 = pneg %p671
    $region42: #{_lambda_.3} parent=5 // pred_check_branch
      %674 = sbr.rel (%p672) target = $region44
    $region43: #{_lambda_.3} parent=5 // pred_region
      %s675 = ssub.s32 %s10, 2
      // Predicated region
      $region45: #{_lambda_.3} parent=43 // pred_check
        %p676 = pneg %p142
      $region46: #{_lambda_.3} parent=43 // pred_check_branch
        %678 = sbr.rel (%p676) target = $region48
      $region47: #{_lambda_.3} parent=43 // pred_region
        %s679 = smul.u32 4, %s22
        %p680 = scmp.lt.s32.totalorder %s21, 1
        %s681 = scalar_select %p680, %s21, 1
        %p682 = scmp.lt.s32.totalorder %s679, 31
        %s683 = scalar_select %p682, %s679, 31
        %s684 = smul.addr %s681, 32
        %s685 = sadd.s32 %s683, %s684
        %s686 = smul.addr %s685, 4
        %s687 = scalar_lea.vmem %s4, %s686
      $region48: #{_lambda_.3} parent=43 // pred_fallthru
        _
    $region44: #{_lambda_.3} parent=5 // pred_fallthru
      _
  $region6: #{_lambda_.3} parent=0 // loop_footer
    %s14 = sadd.s32 1, %s10
  $region7: #{_lambda_.3} parent=0 // loop_footer_branch
    %9 = sbr.rel target = $region3
  $region8: #{_lambda_.3} parent=0 // loop_exit
    _

// kernel: _lambda_.5
$region0: #{_lambda_.5}
  #allocation0 [shape = 'u32[]', space=smem, size = 0x4, offset = 0x4, fixed_abs, tag = 'smem constant byte address 0x4 - core index']
  #allocation1 [shape = 'u32[144,128]{1,0:T(1,128)}', space=vmem, size = 0x12000, scoped, tag = 'internal scratch']
  %s0 = inlined_call_operand.vmem [shape: f32[2,64,32], index: 0, kind: input, shape index: {}]
  %s1 = inlined_call_operand.vmem [shape: bf16[2,64,128], index: 1, kind: input, shape index: {}]
  %s2 = inlined_call_operand.vmem [shape: f32[2,1,32], index: 2, kind: input, shape index: {}]
  %s3 = inlined_call_operand.hbm [shape: f32[2,64,32], index: 3, kind: output, shape index: {}]
  %s4 = sld [smem:[#allocation0]]
  $region45: #{_lambda_.5} parent=0
    _
  %s6 = ssub.s32 1, %s4
  %s7 = scalar_select 0, %s6, %s4
  $region1: #{_lambda_.5} parent=0
    #allocation2 [shape = 'u8[65536]{0}', space=vmem, size = 0x10000, scoped, tag = 'output window, operand 0']
    #allocation3 [shape = 's32[2]{0}', space=sflag, size = 0x8, scoped, tag = 'scoped memory for _lambda_.5']
    %8 = vsyncpa [#allocation3], 0
    %s9 = scalar_lea.sflag [#allocation3], 1
    %10 = vsyncpa %s9, 0
    loop: start=0, step=1, limit=4
    $region2: #{_lambda_.5} parent=1 // loop_pre_header
      _
    $region3: #{_lambda_.5} parent=1 // loop_header
      %s12 = sphi 0, %s16
      %p13 = scmp.ge.s32.totalorder %s12, 4
      %s19 = sphi 0, %s31
      %s20 = sphi 0, %s27
      %s21 = sphi 0, %s19
      %s22 = sphi 0, %s20
      %s23 = sphi 0, %s21
      %s24 = sphi 0, %s22
      %s36 = sphi 0, %s38
      %s39 = sphi 0, %s36
      %s40 = sphi 0, %s39
      %s56 = sphi 0, %s40
      %s64 = sphi 0, %s66
      %s67 = sphi 0, %s64
      %s68 = sphi 0, %s67
      %s84 = sphi 0, %s68
      %s90 = sphi 0, %s92
      %s93 = sphi 0, %s90
      %s94 = sphi 0, %s93
      %s110 = sphi 0, %s94
      %s118 = sphi 0, %s120
      %s121 = sphi 0, %s118
      %s122 = sphi 0, %s121
      %s138 = sphi 0, %s122
    $region4: #{_lambda_.5} parent=1 // loop_header_branch
      %15 = sbr.rel (%p13) target = $region8
    $region5: #{_lambda_.5} parent=1 // loop_body
      %s17 = ssub.s32 %s12, 1
      %s18 = ssub.s32 %s12, 2
      %s25 = sadd.s32 1, %s20
      %p26 = scmp.ge.s32.totalorder %s25, 1
      %s27 = scalar_select %p26, 0, %s25
      %s28 = sadd.s32 1, %s19
      %s29 = scalar_select %p26, %s28, %s19
      %p30 = scmp.ge.s32.totalorder %s29, 2
      %s31 = scalar_select %p30, 0, %s29
      %s32 = ssub.s32 %s19, %s31
      %s33 = ssub.s32 %s20, %s27
      %s34 = sor.u32 %s32, %s33
      %p35 = scmp.eq.s32.totalorder %s34, 0
      %s37 = sadd.s32 %s36, 1
      %s38 = scalar_select %p35, %s36, %s37
      %p41 = pneg %p35
      %p42 = scmp.eq.s32.totalorder %s12, 1
      %p43 = por %p41, %p42
      %p44 = scmp.ne.s32.totalorder %s36, %s39
      %p45 = scmp.eq.s32.totalorder %s12, 0
      %p46 = por %p44, %p45
      %p47 = scmp.ne.s32.totalorder %s36, %s39
      %p48 = scmp.eq.s32.totalorder %s17, 1
      %p49 = por %p47, %p48
      %p50 = scmp.ne.s32.totalorder %s39, %s40
      %p51 = scmp.eq.s32.totalorder %s17, 0
      %p52 = por %p50, %p51
      %p53 = scmp.ne.s32.totalorder %s39, %s40
      %p54 = scmp.eq.s32.totalorder %s18, 1
      %p55 = por %p53, %p54
      %p57 = scmp.ne.s32.totalorder %s40, %s56
      %p58 = scmp.eq.s32.totalorder %s18, 0
      %p59 = por %p57, %p58
      %s60 = ssub.s32 %s19, %s31
      %s61 = ssub.s32 %s20, %s27
      %s62 = sor.u32 %s60, %s61
      %p63 = scmp.eq.s32.totalorder %s62, 0
      %s65 = sadd.s32 %s64, 1
      %s66 = scalar_select %p63, %s64, %s65
      %p69 = pneg %p63
      %p70 = scmp.eq.s32.totalorder %s12, 1
      %p71 = por %p69, %p70
      %p72 = scmp.ne.s32.totalorder %s64, %s67
      %p73 = scmp.eq.s32.totalorder %s12, 0
      %p74 = por %p72, %p73
      %p75 = scmp.ne.s32.totalorder %s64, %s67
      %p76 = scmp.eq.s32.totalorder %s17, 1
      %p77 = por %p75, %p76
      %p78 = scmp.ne.s32.totalorder %s67, %s68
      %p79 = scmp.eq.s32.totalorder %s17, 0
      %p80 = por %p78, %p79
      %p81 = scmp.ne.s32.totalorder %s67, %s68
      %p82 = scmp.eq.s32.totalorder %s18, 1
      %p83 = por %p81, %p82
      %p85 = scmp.ne.s32.totalorder %s68, %s84
      %p86 = scmp.eq.s32.totalorder %s18, 0
      %p87 = por %p85, %p86
      %s88 = ssub.s32 %s19, %s31
      %p89 = scmp.eq.s32.totalorder %s88, 0
      %s91 = sadd.s32 %s90, 1
      %s92 = scalar_select %p89, %s90, %s91
      %p95 = pneg %p89
      %p96 = scmp.eq.s32.totalorder %s12, 1
      %p97 = por %p95, %p96
      %p98 = scmp.ne.s32.totalorder %s90, %s93
      %p99 = scmp.eq.s32.totalorder %s12, 0
      %p100 = por %p98, %p99
      %p101 = scmp.ne.s32.totalorder %s90, %s93
      %p102 = scmp.eq.s32.totalorder %s17, 1
      %p103 = por %p101, %p102
      %p104 = scmp.ne.s32.totalorder %s93, %s94
      %p105 = scmp.eq.s32.totalorder %s17, 0
      %p106 = por %p104, %p105
      %p107 = scmp.ne.s32.totalorder %s93, %s94
      %p108 = scmp.eq.s32.totalorder %s18, 1
      %p109 = por %p107, %p108
      %p111 = scmp.ne.s32.totalorder %s94, %s110
      %p112 = scmp.eq.s32.totalorder %s18, 0
      %p113 = por %p111, %p112
      %s114 = ssub.s32 %s19, %s31
      %s115 = ssub.s32 %s20, %s27
      %s116 = sor.u32 %s114, %s115
      %p117 = scmp.eq.s32.totalorder %s116, 0
      %s119 = sadd.s32 %s118, 1
      %s120 = scalar_select %p117, %s118, %s119
      %p123 = pneg %p117
      %p124 = scmp.eq.s32.totalorder %s12, 1
      %p125 = por %p123, %p124
      %p126 = scmp.ne.s32.totalorder %s118, %s121
      %p127 = scmp.eq.s32.totalorder %s12, 0
      %p128 = por %p126, %p127
      %p129 = scmp.ne.s32.totalorder %s118, %s121
      %p130 = scmp.eq.s32.totalorder %s17, 1
      %p131 = por %p129, %p130
      %p132 = scmp.ne.s32.totalorder %s121, %s122
      %p133 = scmp.eq.s32.totalorder %s17, 0
      %p134 = por %p132, %p133
      %p135 = scmp.ne.s32.totalorder %s121, %s122
      %p136 = scmp.eq.s32.totalorder %s18, 1
      %p137 = por %p135, %p136
      %p139 = scmp.ne.s32.totalorder %s122, %s138
      %p140 = scmp.eq.s32.totalorder %s18, 0
      %p141 = por %p139, %p140
      %p142 = scmp.le.s32.totalorder 1, %s12
      %p143 = scmp.lt.s32.totalorder %s12, 3
      %p144 = pnand %p142, %p143
      %p145 = pneg %p144
      // Predicated region
      $region9: #{_lambda_.5} parent=5 // pred_check
        _
      $region10: #{_lambda_.5} parent=5 // pred_check_branch
        %147 = sbr.rel (%p144) target = $region12
      $region11: #{_lambda_.5} parent=5 // pred_region
        %s148 = ssub.s32 %s12, 1
      $region12: #{_lambda_.5} parent=5 // pred_fallthru
        _
      %p149 = scmp.lt.s32.totalorder %s12, 2
      // Predicated region
      $region13: #{_lambda_.5} parent=5 // pred_check
        %p150 = pneg %p149
      $region14: #{_lambda_.5} parent=5 // pred_check_branch
        %152 = sbr.rel (%p150) target = $region16
      $region15: #{_lambda_.5} parent=5 // pred_region
        // Predicated region
        $region17: #{_lambda_.5} parent=15 // pred_check
          %p153 = pneg %p46
        $region18: #{_lambda_.5} parent=15 // pred_check_branch
          %155 = sbr.rel (%p153) target = $region20
        $region19: #{_lambda_.5} parent=15 // pred_region
          %s156 = smul.u32 8, %s20
          %p157 = scmp.lt.s32.totalorder %s19, 1
          %s158 = scalar_select %p157, %s19, 1
          %p159 = scmp.lt.s32.totalorder %s156, 7
          %s160 = scalar_select %p159, %s156, 7
          %s161 = smul.addr %s158, 8
          %s162 = sadd.s32 %s160, %s161
          %s163 = smul.addr %s162, 8
          %s164 = scalar_lea.vmem %s0, %s163
          %s165 = smul.u32 8, %s20
        $region20: #{_lambda_.5} parent=15 // pred_fallthru
          _
        // Predicated region
        $region21: #{_lambda_.5} parent=15 // pred_check
          %p166 = pneg %p74
        $region22: #{_lambda_.5} parent=15 // pred_check_branch
          %168 = sbr.rel (%p166) target = $region24
        $region23: #{_lambda_.5} parent=15 // pred_region
          %s169 = smul.u32 8, %s20
          %p170 = scmp.lt.s32.totalorder %s19, 1
          %s171 = scalar_select %p170, %s19, 1
          %p172 = scmp.lt.s32.totalorder %s169, 7
          %s173 = scalar_select %p172, %s169, 7
          %s174 = smul.addr %s171, 8
          %s175 = sadd.s32 %s173, %s174
          %s176 = smul.addr %s175, 4
          %s177 = scalar_lea.vmem %s1, %s176
          %s178 = smul.u32 8, %s20
        $region24: #{_lambda_.5} parent=15 // pred_fallthru
          _
        // Predicated region
        $region25: #{_lambda_.5} parent=15 // pred_check
          %p179 = pneg %p100
        $region26: #{_lambda_.5} parent=15 // pred_check_branch
          %181 = sbr.rel (%p179) target = $region28
        $region27: #{_lambda_.5} parent=15 // pred_region
          %p182 = scmp.lt.s32.totalorder %s19, 1
          %s183 = scalar_select %p182, %s19, 1
          %s184 = scalar_lea.vmem %s2, %s183
        $region28: #{_lambda_.5} parent=15 // pred_fallthru
          _
      $region16: #{_lambda_.5} parent=5 // pred_fallthru
        _
      %p185 = scmp.le.s32.totalorder 1, %s12
      %p186 = scmp.lt.s32.totalorder %s12, 3
      %p187 = pnand %p185, %p186
      %p188 = pneg %p187
      // Predicated region
      $region29: #{_lambda_.5} parent=5 // pred_check
        _
      $region30: #{_lambda_.5} parent=5 // pred_check_branch
        %190 = sbr.rel (%p187) target = $region32
      $region31: #{_lambda_.5} parent=5 // pred_region
        %s191 = ssub.s32 %s12, 1
        %s192 = smul.u32 8, %s22
        %p193 = scmp.lt.s32.totalorder %s21, 1
        %s194 = scalar_select %p193, %s21, 1
        %p195 = scmp.lt.s32.totalorder %s192, 7
        %s196 = scalar_select %p195, %s192, 7
        %s197 = smul.addr %s194, 8
        %s198 = sadd.s32 %s196, %s197
        %s199 = smul.addr %s198, 8
        %s200 = scalar_lea.vmem %s0, %s199
        %p201 = pneg %p52
        %p202 = pneg %p49
        %s203 = smul.u32 8, %s22
        %p204 = scmp.lt.s32.totalorder %s21, 1
        %s205 = scalar_select %p204, %s21, 1
        %p206 = scmp.lt.s32.totalorder %s203, 7
        %s207 = scalar_select %p206, %s203, 7
        %s208 = smul.addr %s205, 8
        %s209 = sadd.s32 %s207, %s208
        %s210 = smul.addr %s209, 4
        %s211 = scalar_lea.vmem %s1, %s210
        %p212 = pneg %p80
        %p213 = pneg %p77
        %p214 = scmp.lt.s32.totalorder %s21, 1
        %s215 = scalar_select %p214, %s21, 1
        %s216 = scalar_lea.vmem %s2, %s215
        %p217 = pneg %p106
        %p218 = pneg %p103
        %p219 = pneg %p134
        %p220 = pneg %p131
        %s221 = sand.u32 %s121, 1
        %s222 = scalar_lea.sflag [#allocation3], %s221
        %s223 = sand.u32 %s121, 1
        %s224 = smul.addr %s223, 64
        %s225 = scalar_lea.vmem [#allocation2], %s224
        %s226 = smul.u32 8, %s22
        %p227 = scmp.lt.s32.totalorder %s21, 1
        %s228 = scalar_select %p227, %s21, 1
        %p229 = scmp.lt.s32.totalorder %s226, 7
        %s230 = scalar_select %p229, %s226, 7
        %s231 = smul.addr %s228, 8
        %s232 = sadd.s32 %s230, %s231
        %s233 = smul.addr %s232, 8
        %s234 = scalar_lea.vmem %s0, %s233
        %s235 = smul.u32 8, %s22
        %s236 = smul.u32 8, %s22
        %p237 = scmp.lt.s32.totalorder %s21, 1
        %s238 = scalar_select %p237, %s21, 1
        %p239 = scmp.lt.s32.totalorder %s236, 7
        %s240 = scalar_select %p239, %s236, 7
        %s241 = smul.addr %s238, 8
        %s242 = sadd.s32 %s240, %s241
        %s243 = smul.addr %s242, 4
        %s244 = scalar_lea.vmem %s1, %s243
        %s245 = smul.u32 8, %s22
        %p246 = scmp.lt.s32.totalorder %s21, 1
        %s247 = scalar_select %p246, %s21, 1
        %s248 = scalar_lea.vmem %s2, %s247
        %s249 = smul.u32 8, %s22
        %v250 = vld [vmem:[%s244] sm:$0xf]
        %v251 = vld [vmem:[%s244 + $0x4] sm:$0xf]
        %v252 = vld [vmem:[%s244 + $0x8] sm:$0xf]
        %v253 = vld [vmem:[%s244 + $0xc] sm:$0xf]
        %v254 = vld [vmem:[%s244 + $0x10] sm:$0xf]
        %v255 = vld [vmem:[%s244 + $0x14] sm:$0xf]
        %v256 = vld [vmem:[%s244 + $0x18] sm:$0xf]
        %v257 = vld [vmem:[%s244 + $0x1c] sm:$0xf]
        %v258 = vunpack.c.l.bf16 %v250
        %v259 = vunpack.c.l.bf16 %v251
        %v260 = vunpack.c.l.bf16 %v252
        %v261 = vunpack.c.l.bf16 %v253
        %v262 = vunpack.c.l.bf16 %v254
        %v263 = vunpack.c.l.bf16 %v255
        %v264 = vunpack.c.l.bf16 %v256
        %v265 = vunpack.c.l.bf16 %v257
        %v266 = vld [vmem:[%s234] sm:$0xff]
        %v267 = vld [vmem:[%s234 + $0x8] sm:$0xff]
        %v268 = vld [vmem:[%s234 + $0x10] sm:$0xff]
        %v269 = vld [vmem:[%s234 + $0x18] sm:$0xff]
        %v270 = vld [vmem:[%s234 + $0x20] sm:$0xff]
        %v271 = vld [vmem:[%s234 + $0x28] sm:$0xff]
        %v272 = vld [vmem:[%s234 + $0x30] sm:$0xff]
        %v273 = vld [vmem:[%s234 + $0x38] sm:$0xff]
        %v274 = vld [vmem:[%s248] sm:$0x1]
        %v276 = vlaneseq
        %v277 = vshrl.u32 %v276, 7
        %v278 = vsub.s32 0, %v277
        %v279 = vrot.slane %v274, %v278
        %v281 = vmul.f32 %v258, %v279
        %v282 = vmul.f32 %v259, %v279
        %v283 = vmul.f32 %v260, %v279
        %v284 = vmul.f32 %v261, %v279
        %v285 = vmul.f32 %v262, %v279
        %v286 = vmul.f32 %v263, %v279
        %v287 = vmul.f32 %v264, %v279
        %v288 = vmul.f32 %v265, %v279
        %v289 = vadd.f32 %v266, %v281
        %v290 = vadd.f32 %v267, %v282
        %v291 = vadd.f32 %v268, %v283
        %v292 = vadd.f32 %v269, %v284
        %v293 = vadd.f32 %v270, %v285
        %v294 = vadd.f32 %v271, %v286
        %v295 = vadd.f32 %v272, %v287
        %v296 = vadd.f32 %v273, %v288
        %vm297 = vcmask 261120
        %298 = vst.msk [vmem:[%s225] sm:$0xff] %vm297, %v289
        %299 = vst.msk [vmem:[%s225 + $0x8] sm:$0xff] %vm297, %v290
        %300 = vst.msk [vmem:[%s225 + $0x10] sm:$0xff] %vm297, %v291
        %301 = vst.msk [vmem:[%s225 + $0x18] sm:$0xff] %vm297, %v292
        %302 = vst.msk [vmem:[%s225 + $0x20] sm:$0xff] %vm297, %v293
        %303 = vst.msk [vmem:[%s225 + $0x28] sm:$0xff] %vm297, %v294
        %304 = vst.msk [vmem:[%s225 + $0x30] sm:$0xff] %vm297, %v295
        %305 = vst.msk [vmem:[%s225 + $0x38] sm:$0xff] %vm297, %v296
        %s306 = sand.u32 %s121, 1
        %s307 = scalar_lea.sflag [#allocation3], %s306
        %s308 = sand.u32 %s121, 1
        %s309 = smul.addr %s308, 64
        %s310 = scalar_lea.vmem [#allocation2], %s309
        // Predicated region
        $region33: #{_lambda_.5} parent=31 // pred_check
          %p311 = pneg %p131
        $region34: #{_lambda_.5} parent=31 // pred_check_branch
          %313 = sbr.rel (%p311) target = $region36
        $region35: #{_lambda_.5} parent=31 // pred_region
          %s314 = smul.u32 8, %s22
          %s316 = ssub.s32 1024, 1024
          %317 = vsyncadd %s307, %s316
          %s318 = smul.addr %s21, 8
          %s319 = sadd.s32 %s314, %s318
          %s320 = smul.addr %s319, 128
          %s321 = scalar_lea.hbm %s3, %s320
          %s322 = sshll.u32 %s310, 4
          %s323 = int_to_ptr.vmem [resolvable:$true] %s322
          %328 = dma.vmem_to_hbm [thread:$0]  %s323, 1024, %s321, %s307, 128, 128, 8
        $region36: #{_lambda_.5} parent=31 // pred_fallthru
          _
      $region32: #{_lambda_.5} parent=5 // pred_fallthru
        _
      %p329 = scmp.le.s32.totalorder 2, %s12
      // Predicated region
      $region37: #{_lambda_.5} parent=5 // pred_check
        %p330 = pneg %p329
      $region38: #{_lambda_.5} parent=5 // pred_check_branch
        %332 = sbr.rel (%p330) target = $region40
      $region39: #{_lambda_.5} parent=5 // pred_region
        %s333 = ssub.s32 %s12, 2
        // Predicated region
        $region41: #{_lambda_.5} parent=39 // pred_check
          %p334 = pneg %p137
        $region42: #{_lambda_.5} parent=39 // pred_check_branch
          %336 = sbr.rel (%p334) target = $region44
        $region43: #{_lambda_.5} parent=39 // pred_region
          %s337 = sand.u32 %s122, 1
          %s338 = scalar_lea.sflag [#allocation3], %s337
          %s339 = sand.u32 %s122, 1
          %s340 = smul.addr %s339, 64
          %s341 = scalar_lea.vmem [#allocation2], %s340
          %342 = dma.done %s338, 1024
        $region44: #{_lambda_.5} parent=39 // pred_fallthru
          _
      $region40: #{_lambda_.5} parent=5 // pred_fallthru
        _
    $region6: #{_lambda_.5} parent=1 // loop_footer
      %s16 = sadd.s32 1, %s12
    $region7: #{_lambda_.5} parent=1 // loop_footer_branch
      %11 = sbr.rel target = $region3
    $region8: #{_lambda_.5} parent=1 // loop_exit
      _
    %343 = vsyncpa [#allocation3], 1
    %s344 = scalar_lea.sflag [#allocation3], 1
    %345 = vsyncpa %s344, 1

// kernel: _lambda_.4
$region0: #{_lambda_.4}
  #allocation0 [shape = 'u32[]', space=smem, size = 0x4, offset = 0x4, fixed_abs, tag = 'smem constant byte address 0x4 - core index']
  #allocation1 [shape = 'u32[144,128]{1,0:T(1,128)}', space=vmem, size = 0x12000, scoped, tag = 'internal scratch']
  %s0 = inlined_call_operand.vmem [shape: bf16[2,18,9,256], index: 0, kind: input, shape index: {}]
  %s1 = inlined_call_operand.vmem [shape: bf16[3,384,128], index: 1, kind: input, shape index: {}]
  %s2 = inlined_call_operand.vmem [shape: f32[1,128], index: 2, kind: input, shape index: {}]
  %s3 = inlined_call_operand.vmem [shape: f32[1,128], index: 3, kind: input, shape index: {}]
  %s4 = inlined_call_operand.vmem [shape: bf16[2,64,128], index: 4, kind: output, shape index: {0}]
  %s5 = inlined_call_operand.vmem [shape: f32[2,16,128], index: 5, kind: output, shape index: {1}]
  %6 = xla_tuple %s4, %s5
  %s7 = sld [smem:[#allocation0]]
  $region57: #{_lambda_.4} parent=0
    _
  %s9 = ssub.s32 1, %s7
  %s10 = scalar_select 0, %s9, %s7
  loop: start=0, step=1, limit=6
  $region2: #{_lambda_.4} parent=0 // loop_pre_header
    _
  $region3: #{_lambda_.4} parent=0 // loop_header
    %s12 = sphi 0, %s16
    %p13 = scmp.ge.s32.totalorder %s12, 6
    %s19 = sphi 0, %s31
    %s20 = sphi 0, %s27
    %s21 = sphi 0, %s19
    %s22 = sphi 0, %s20
    %s23 = sphi 0, %s21
    %s24 = sphi 0, %s22
    %s34 = sphi 0, %s36
    %s37 = sphi 0, %s34
    %s38 = sphi 0, %s37
    %s54 = sphi 0, %s38
    %s58 = sphi 0, %s58
    %s60 = sphi 0, %s58
    %s61 = sphi 0, %s60
    %s75 = sphi 0, %s61
    %s79 = sphi 0, %s79
    %s81 = sphi 0, %s79
    %s82 = sphi 0, %s81
    %s96 = sphi 0, %s82
    %s100 = sphi 0, %s100
    %s102 = sphi 0, %s100
    %s103 = sphi 0, %s102
    %s117 = sphi 0, %s103
    %s125 = sphi 0, %s127
    %s128 = sphi 0, %s125
    %s129 = sphi 0, %s128
    %s145 = sphi 0, %s129
    %s153 = sphi 0, %s155
    %s156 = sphi 0, %s153
    %s157 = sphi 0, %s156
    %s173 = sphi 0, %s157
  $region4: #{_lambda_.4} parent=0 // loop_header_branch
    %15 = sbr.rel (%p13) target = $region8
  $region5: #{_lambda_.4} parent=0 // loop_body
    %s17 = ssub.s32 %s12, 1
    %s18 = ssub.s32 %s12, 2
    %s25 = sadd.s32 1, %s20
    %p26 = scmp.ge.s32.totalorder %s25, 2
    %s27 = scalar_select %p26, 0, %s25
    %s28 = sadd.s32 1, %s19
    %s29 = scalar_select %p26, %s28, %s19
    %p30 = scmp.ge.s32.totalorder %s29, 2
    %s31 = scalar_select %p30, 0, %s29
    %s32 = ssub.s32 %s19, %s31
    %p33 = scmp.eq.s32.totalorder %s32, 0
    %s35 = sadd.s32 %s34, 1
    %s36 = scalar_select %p33, %s34, %s35
    %p39 = pneg %p33
    %p40 = scmp.eq.s32.totalorder %s12, 3
    %p41 = por %p39, %p40
    %p42 = scmp.ne.s32.totalorder %s34, %s37
    %p43 = scmp.eq.s32.totalorder %s12, 0
    %p44 = por %p42, %p43
    %p45 = scmp.ne.s32.totalorder %s34, %s37
    %p46 = scmp.eq.s32.totalorder %s17, 3
    %p47 = por %p45, %p46
    %p48 = scmp.ne.s32.totalorder %s37, %s38
    %p49 = scmp.eq.s32.totalorder %s17, 0
    %p50 = por %p48, %p49
    %p51 = scmp.ne.s32.totalorder %s37, %s38
    %p52 = scmp.eq.s32.totalorder %s18, 3
    %p53 = por %p51, %p52
    %p55 = scmp.ne.s32.totalorder %s38, %s54
    %p56 = scmp.eq.s32.totalorder %s18, 0
    %p57 = por %p55, %p56
    %s59 = sadd.s32 %s58, 1
    %p62 = scmp.eq.s32.totalorder %s12, 3
    %p63 = scmp.ne.s32.totalorder %s58, %s60
    %p64 = scmp.eq.s32.totalorder %s12, 0
    %p65 = por %p63, %p64
    %p66 = scmp.ne.s32.totalorder %s58, %s60
    %p67 = scmp.eq.s32.totalorder %s17, 3
    %p68 = por %p66, %p67
    %p69 = scmp.ne.s32.totalorder %s60, %s61
    %p70 = scmp.eq.s32.totalorder %s17, 0
    %p71 = por %p69, %p70
    %p72 = scmp.ne.s32.totalorder %s60, %s61
    %p73 = scmp.eq.s32.totalorder %s18, 3
    %p74 = por %p72, %p73
    %p76 = scmp.ne.s32.totalorder %s61, %s75
    %p77 = scmp.eq.s32.totalorder %s18, 0
    %p78 = por %p76, %p77
    %s80 = sadd.s32 %s79, 1
    %p83 = scmp.eq.s32.totalorder %s12, 3
    %p84 = scmp.ne.s32.totalorder %s79, %s81
    %p85 = scmp.eq.s32.totalorder %s12, 0
    %p86 = por %p84, %p85
    %p87 = scmp.ne.s32.totalorder %s79, %s81
    %p88 = scmp.eq.s32.totalorder %s17, 3
    %p89 = por %p87, %p88
    %p90 = scmp.ne.s32.totalorder %s81, %s82
    %p91 = scmp.eq.s32.totalorder %s17, 0
    %p92 = por %p90, %p91
    %p93 = scmp.ne.s32.totalorder %s81, %s82
    %p94 = scmp.eq.s32.totalorder %s18, 3
    %p95 = por %p93, %p94
    %p97 = scmp.ne.s32.totalorder %s82, %s96
    %p98 = scmp.eq.s32.totalorder %s18, 0
    %p99 = por %p97, %p98
    %s101 = sadd.s32 %s100, 1
    %p104 = scmp.eq.s32.totalorder %s12, 3
    %p105 = scmp.ne.s32.totalorder %s100, %s102
    %p106 = scmp.eq.s32.totalorder %s12, 0
    %p107 = por %p105, %p106
    %p108 = scmp.ne.s32.totalorder %s100, %s102
    %p109 = scmp.eq.s32.totalorder %s17, 3
    %p110 = por %p108, %p109
    %p111 = scmp.ne.s32.totalorder %s102, %s103
    %p112 = scmp.eq.s32.totalorder %s17, 0
    %p113 = por %p111, %p112
    %p114 = scmp.ne.s32.totalorder %s102, %s103
    %p115 = scmp.eq.s32.totalorder %s18, 3
    %p116 = por %p114, %p115
    %p118 = scmp.ne.s32.totalorder %s103, %s117
    %p119 = scmp.eq.s32.totalorder %s18, 0
    %p120 = por %p118, %p119
    %s121 = ssub.s32 %s19, %s31
    %s122 = ssub.s32 %s20, %s27
    %s123 = sor.u32 %s121, %s122
    %p124 = scmp.eq.s32.totalorder %s123, 0
    %s126 = sadd.s32 %s125, 1
    %s127 = scalar_select %p124, %s125, %s126
    %p130 = pneg %p124
    %p131 = scmp.eq.s32.totalorder %s12, 3
    %p132 = por %p130, %p131
    %p133 = scmp.ne.s32.totalorder %s125, %s128
    %p134 = scmp.eq.s32.totalorder %s12, 0
    %p135 = por %p133, %p134
    %p136 = scmp.ne.s32.totalorder %s125, %s128
    %p137 = scmp.eq.s32.totalorder %s17, 3
    %p138 = por %p136, %p137
    %p139 = scmp.ne.s32.totalorder %s128, %s129
    %p140 = scmp.eq.s32.totalorder %s17, 0
    %p141 = por %p139, %p140
    %p142 = scmp.ne.s32.totalorder %s128, %s129
    %p143 = scmp.eq.s32.totalorder %s18, 3
    %p144 = por %p142, %p143
    %p146 = scmp.ne.s32.totalorder %s129, %s145
    %p147 = scmp.eq.s32.totalorder %s18, 0
    %p148 = por %p146, %p147
    %s149 = ssub.s32 %s19, %s31
    %s150 = ssub.s32 %s20, %s27
    %s151 = sor.u32 %s149, %s150
    %p152 = scmp.eq.s32.totalorder %s151, 0
    %s154 = sadd.s32 %s153, 1
    %s155 = scalar_select %p152, %s153, %s154
    %p158 = pneg %p152
    %p159 = scmp.eq.s32.totalorder %s12, 3
    %p160 = por %p158, %p159
    %p161 = scmp.ne.s32.totalorder %s153, %s156
    %p162 = scmp.eq.s32.totalorder %s12, 0
    %p163 = por %p161, %p162
    %p164 = scmp.ne.s32.totalorder %s153, %s156
    %p165 = scmp.eq.s32.totalorder %s17, 3
    %p166 = por %p164, %p165
    %p167 = scmp.ne.s32.totalorder %s156, %s157
    %p168 = scmp.eq.s32.totalorder %s17, 0
    %p169 = por %p167, %p168
    %p170 = scmp.ne.s32.totalorder %s156, %s157
    %p171 = scmp.eq.s32.totalorder %s18, 3
    %p172 = por %p170, %p171
    %p174 = scmp.ne.s32.totalorder %s157, %s173
    %p175 = scmp.eq.s32.totalorder %s18, 0
    %p176 = por %p174, %p175
    %p177 = scmp.le.s32.totalorder 1, %s12
    %p178 = scmp.lt.s32.totalorder %s12, 5
    %p179 = pnand %p177, %p178
    %p180 = pneg %p179
    // Predicated region
    $region9: #{_lambda_.4} parent=5 // pred_check
      _
    $region10: #{_lambda_.4} parent=5 // pred_check_branch
      %182 = sbr.rel (%p179) target = $region12
    $region11: #{_lambda_.4} parent=5 // pred_region
      %s183 = ssub.s32 %s12, 1
      // Predicated region
      $region13: #{_lambda_.4} parent=11 // pred_check
        %p184 = pneg %p71
      $region14: #{_lambda_.4} parent=11 // pred_check_branch
        %186 = sbr.rel (%p184) target = $region16
      $region15: #{_lambda_.4} parent=11 // pred_region
        _
      $region16: #{_lambda_.4} parent=11 // pred_fallthru
        _
      // Predicated region
      $region17: #{_lambda_.4} parent=11 // pred_check
        %p187 = pneg %p92
      $region18: #{_lambda_.4} parent=11 // pred_check_branch
        %189 = sbr.rel (%p187) target = $region20
      $region19: #{_lambda_.4} parent=11 // pred_region
        _
      $region20: #{_lambda_.4} parent=11 // pred_fallthru
        _
      // Predicated region
      $region21: #{_lambda_.4} parent=11 // pred_check
        %p190 = pneg %p113
      $region22: #{_lambda_.4} parent=11 // pred_check_branch
        %192 = sbr.rel (%p190) target = $region24
      $region23: #{_lambda_.4} parent=11 // pred_region
        _
      $region24: #{_lambda_.4} parent=11 // pred_fallthru
        _
    $region12: #{_lambda_.4} parent=5 // pred_fallthru
      _
    %p193 = scmp.lt.s32.totalorder %s12, 4
    // Predicated region
    $region25: #{_lambda_.4} parent=5 // pred_check
      %p194 = pneg %p193
    $region26: #{_lambda_.4} parent=5 // pred_check_branch
      %196 = sbr.rel (%p194) target = $region28
    $region27: #{_lambda_.4} parent=5 // pred_region
      // Predicated region
      $region29: #{_lambda_.4} parent=27 // pred_check
        %p197 = pneg %p44
      $region30: #{_lambda_.4} parent=27 // pred_check_branch
        %199 = sbr.rel (%p197) target = $region32
      $region31: #{_lambda_.4} parent=27 // pred_region
        %p200 = scmp.lt.s32.totalorder %s19, 1
        %s201 = scalar_select %p200, %s19, 1
        %s202 = smul.addr %s201, 72
        %s203 = smul.addr %s202, 4
        %s204 = scalar_lea.vmem %s0, %s203
      $region32: #{_lambda_.4} parent=27 // pred_fallthru
        _
    $region28: #{_lambda_.4} parent=5 // pred_fallthru
      _
    %p205 = scmp.le.s32.totalorder 1, %s12
    %p206 = scmp.lt.s32.totalorder %s12, 5
    %p207 = pnand %p205, %p206
    %p208 = pneg %p207
    // Predicated region
    $region33: #{_lambda_.4} parent=5 // pred_check
      _
    $region34: #{_lambda_.4} parent=5 // pred_check_branch
      %210 = sbr.rel (%p207) target = $region36
    $region35: #{_lambda_.4} parent=5 // pred_region
      %s211 = ssub.s32 %s12, 1
      %p212 = scmp.lt.s32.totalorder %s21, 1
      %s213 = scalar_select %p212, %s21, 1
      %s214 = smul.addr %s213, 72
      %s215 = smul.addr %s214, 4
      %s216 = scalar_lea.vmem %s0, %s215
      %p217 = pneg %p50
      %p218 = pneg %p47
      %p219 = pneg %p71
      %p220 = pneg %p68
      %p221 = pneg %p92
      %p222 = pneg %p89
      %p223 = pneg %p113
      %p224 = pneg %p110
      %p225 = pneg %p141
      %p226 = pneg %p138
      %s227 = smul.u32 4, %s22
      %p228 = scmp.lt.s32.totalorder %s21, 1
      %s229 = scalar_select %p228, %s21, 1
      %p230 = scmp.lt.s32.totalorder %s227, 7
      %s231 = scalar_select %p230, %s227, 7
      %s232 = smul.addr %s229, 8
      %s233 = sadd.s32 %s231, %s232
      %s234 = smul.addr %s233, 4
      %s235 = scalar_lea.vmem %s4, %s234
      %p236 = pneg %p169
      %p237 = pneg %p166
      %p238 = scmp.lt.s32.totalorder %s21, 1
      %s239 = scalar_select %p238, %s21, 1
      %p240 = scmp.lt.s32.totalorder %s22, 1
      %s241 = scalar_select %p240, %s22, 1
      %s242 = smul.addr %s239, 2
      %s243 = sadd.s32 %s241, %s242
      %s244 = smul.addr %s243, 8
      %s245 = scalar_lea.vmem %s5, %s244
      %p246 = scmp.lt.s32.totalorder %s21, 1
      %s247 = scalar_select %p246, %s21, 1
      %s248 = smul.addr %s247, 72
      %s249 = smul.addr %s248, 4
      %s250 = scalar_lea.vmem %s0, %s249
      %s251 = smul.u32 4, %s22
      %p252 = scmp.lt.s32.totalorder %s21, 1
      %s253 = scalar_select %p252, %s21, 1
      %p254 = scmp.lt.s32.totalorder %s251, 7
      %s255 = scalar_select %p254, %s251, 7
      %s256 = smul.addr %s253, 8
      %s257 = sadd.s32 %s255, %s256
      %s258 = smul.addr %s257, 4
      %s259 = scalar_lea.vmem %s4, %s258
      %s260 = smul.u32 4, %s22
      %p261 = scmp.lt.s32.totalorder %s21, 1
      %s262 = scalar_select %p261, %s21, 1
      %p263 = scmp.lt.s32.totalorder %s22, 1
      %s264 = scalar_select %p263, %s22, 1
      %s265 = smul.addr %s262, 2
      %s266 = sadd.s32 %s264, %s265
      %s267 = smul.addr %s266, 8
      %s268 = scalar_lea.vmem %s5, %s267
      %s270 = smul.u32 %s22, 8
      %s271 = smul.u32 %s270, 4
      %s272 = smul.addr %s271, 4
      %s273 = scalar_lea.vmem %s250, %s272
      %v274 = vld [vmem:[%s273] sm:$0xff]
      %v275 = vld [vmem:[%s273 + $0x8] sm:$0x11]
      %v276 = vld [vmem:[%s273 + $0x10] sm:$0xff]
      %v277 = vld [vmem:[%s273 + $0x18] sm:$0x11]
      %v278 = vld [vmem:[%s273 + $0x20] sm:$0xff]
      %v279 = vld [vmem:[%s273 + $0x28] sm:$0x11]
      %v280 = vld [vmem:[%s273 + $0x30] sm:$0xff]
      %v281 = vld [vmem:[%s273 + $0x38] sm:$0x11]
      %v282 = vld [vmem:[%s273 + $0x40] sm:$0xff]
      %v283 = vld [vmem:[%s273 + $0x48] sm:$0x11]
      %v284 = vld [vmem:[%s273 + $0x50] sm:$0xff]
      %v285 = vld [vmem:[%s273 + $0x58] sm:$0x11]
      %v286 = vld [vmem:[%s273 + $0x60] sm:$0xff]
      %v287 = vld [vmem:[%s273 + $0x68] sm:$0x11]
      %v288 = vld [vmem:[%s273 + $0x70] sm:$0xff]
      %v289 = vld [vmem:[%s273 + $0x78] sm:$0x11]
      %s290 = sadd.s32 %s270, 2
      %s291 = smul.u32 %s290, 4
      %s292 = smul.addr %s291, 4
      %s293 = scalar_lea.vmem %s250, %s292
      %v294 = vld [vmem:[%s293] sm:$0xff]
      %v295 = vld [vmem:[%s293 + $0x8] sm:$0x11]
      %v296 = vld [vmem:[%s293 + $0x20] sm:$0xff]
      %v297 = vld [vmem:[%s293 + $0x28] sm:$0x11]
      %v298 = vld [vmem:[%s293 + $0x40] sm:$0xff]
      %v299 = vld [vmem:[%s293 + $0x48] sm:$0x11]
      %v300 = vld [vmem:[%s293 + $0x60] sm:$0xff]
      %v301 = vld [vmem:[%s293 + $0x68] sm:$0x11]
      %v306 = vunpack.c.l.b16 %v274
      %v307 = vunpack.c.h.b16 %v274
      %v308 = vunpack.c.l.b16 %v278
      %v309 = vunpack.c.h.b16 %v278
      %v310 = vunpack.c.l.b16 %v282
      %v311 = vunpack.c.h.b16 %v282
      %v312 = vunpack.c.l.b16 %v286
      %v313 = vunpack.c.h.b16 %v286
      %v318 = vunpack.c.l.b16 %v275
      %v319 = vunpack.c.l.b16 %v279
      %v320 = vunpack.c.l.b16 %v283
      %v321 = vunpack.c.l.b16 %v287
      %v322 = vpack.c.b16 %v318, %v306
      %v323 = vpack.c.b16 %v319, %v308
      %v324 = vpack.c.b16 %v320, %v310
      %v325 = vpack.c.b16 %v321, %v312
      %v327 = vshrl.u32 %v322, 16
      %v329 = vshll.u32 %v322, 16
      %v331 = vrot.slane %v329, 1
      %v332 = vor.u32 %v327, %v331
      %v334 = vshrl.u32 %v323, 16
      %v336 = vshll.u32 %v323, 16
      %v338 = vrot.slane %v336, 1
      %v339 = vor.u32 %v334, %v338
      %v341 = vshrl.u32 %v324, 16
      %v343 = vshll.u32 %v324, 16
      %v345 = vrot.slane %v343, 1
      %v346 = vor.u32 %v341, %v345
      %v348 = vshrl.u32 %v325, 16
      %v350 = vshll.u32 %v325, 16
      %v352 = vrot.slane %v350, 1
      %v353 = vor.u32 %v348, %v352
      %v354 = vunpack.c.l.b16 %v332
      %v355 = vunpack.c.l.b16 %v339
      %v356 = vunpack.c.l.b16 %v346
      %v357 = vunpack.c.l.b16 %v353
      %v358 = vld [vmem:[%s1] sm:$0xf]
      %v359 = vld [vmem:[%s1 + $0x4] sm:$0xf]
      %v360 = vld [vmem:[%s1 + $0x8] sm:$0xf]
      %v361 = vld [vmem:[%s1 + $0xc] sm:$0xf]
      %v362 = vld [vmem:[%s1 + $0x10] sm:$0xf]
      %v363 = vld [vmem:[%s1 + $0x14] sm:$0xf]
      %v364 = vld [vmem:[%s1 + $0x18] sm:$0xf]
      %v365 = vld [vmem:[%s1 + $0x1c] sm:$0xf]
      %v366 = vld [vmem:[%s1 + $0x20] sm:$0xf]
      %v367 = vld [vmem:[%s1 + $0x24] sm:$0xf]
      %v368 = vld [vmem:[%s1 + $0x28] sm:$0xf]
      %v369 = vld [vmem:[%s1 + $0x2c] sm:$0xf]
      %v370 = vld [vmem:[%s1 + $0x30] sm:$0xf]
      %v371 = vld [vmem:[%s1 + $0x34] sm:$0xf]
      %v372 = vld [vmem:[%s1 + $0x38] sm:$0xf]
      %v373 = vld [vmem:[%s1 + $0x3c] sm:$0xf]
      %v374 = vld [vmem:[%s1 + $0x40] sm:$0xf]
      %v375 = vld [vmem:[%s1 + $0x44] sm:$0xf]
      %v376 = vld [vmem:[%s1 + $0x48] sm:$0xf]
      %v377 = vld [vmem:[%s1 + $0x4c] sm:$0xf]
      %v378 = vld [vmem:[%s1 + $0x50] sm:$0xf]
      %v379 = vld [vmem:[%s1 + $0x54] sm:$0xf]
      %v380 = vld [vmem:[%s1 + $0x58] sm:$0xf]
      %v381 = vld [vmem:[%s1 + $0x5c] sm:$0xf]
      %v382 = vld [vmem:[%s1 + $0x60] sm:$0xf]
      %v383 = vld [vmem:[%s1 + $0x64] sm:$0xf]
      %v384 = vld [vmem:[%s1 + $0x68] sm:$0xf]
      %v385 = vld [vmem:[%s1 + $0x6c] sm:$0xf]
      %v386 = vld [vmem:[%s1 + $0x70] sm:$0xf]
      %v387 = vld [vmem:[%s1 + $0x74] sm:$0xf]
      %v388 = vld [vmem:[%s1 + $0x78] sm:$0xf]
      %v389 = vld [vmem:[%s1 + $0x7c] sm:$0xf]
      %v390 = vld [vmem:[%s1 + $0x80] sm:$0xf]
      %v391 = vld [vmem:[%s1 + $0x84] sm:$0xf]
      %v392 = vld [vmem:[%s1 + $0x88] sm:$0xf]
      %v393 = vld [vmem:[%s1 + $0x8c] sm:$0xf]
      %v394 = vld [vmem:[%s1 + $0x90] sm:$0xf]
      %v395 = vld [vmem:[%s1 + $0x94] sm:$0xf]
      %v396 = vld [vmem:[%s1 + $0x98] sm:$0xf]
      %v397 = vld [vmem:[%s1 + $0x9c] sm:$0xf]
      %v398 = vld [vmem:[%s1 + $0xa0] sm:$0xf]
      %v399 = vld [vmem:[%s1 + $0xa4] sm:$0xf]
      %v400 = vld [vmem:[%s1 + $0xa8] sm:$0xf]
      %v401 = vld [vmem:[%s1 + $0xac] sm:$0xf]
      %v402 = vld [vmem:[%s1 + $0xb0] sm:$0xf]
      %v403 = vld [vmem:[%s1 + $0xb4] sm:$0xf]
      %v404 = vld [vmem:[%s1 + $0xb8] sm:$0xf]
      %v405 = vld [vmem:[%s1 + $0xbc] sm:$0xf]
      %v410 = vunpack.c.l.b16 %v276
      %v411 = vunpack.c.h.b16 %v276
      %v412 = vunpack.c.l.b16 %v280
      %v413 = vunpack.c.h.b16 %v280
      %v414 = vunpack.c.l.b16 %v284
      %v415 = vunpack.c.h.b16 %v284
      %v416 = vunpack.c.l.b16 %v288
      %v417 = vunpack.c.h.b16 %v288
      %v422 = vunpack.c.l.b16 %v277
      %v423 = vunpack.c.l.b16 %v281
      %v424 = vunpack.c.l.b16 %v285
      %v425 = vunpack.c.l.b16 %v289
      %v426 = vpack.c.b16 %v422, %v410
      %v427 = vpack.c.b16 %v423, %v412
      %v428 = vpack.c.b16 %v424, %v414
      %v429 = vpack.c.b16 %v425, %v416
      %v431 = vshrl.u32 %v426, 16
      %v433 = vshll.u32 %v426, 16
      %v435 = vrot.slane %v433, 1
      %v436 = vor.u32 %v431, %v435
      %v438 = vshrl.u32 %v427, 16
      %v440 = vshll.u32 %v427, 16
      %v442 = vrot.slane %v440, 1
      %v443 = vor.u32 %v438, %v442
      %v445 = vshrl.u32 %v428, 16
      %v447 = vshll.u32 %v428, 16
      %v449 = vrot.slane %v447, 1
      %v450 = vor.u32 %v445, %v449
      %v452 = vshrl.u32 %v429, 16
      %v454 = vshll.u32 %v429, 16
      %v456 = vrot.slane %v454, 1
      %v457 = vor.u32 %v452, %v456
      %v458 = vunpack.c.l.b16 %v436
      %v459 = vunpack.c.l.b16 %v443
      %v460 = vunpack.c.l.b16 %v450
      %v461 = vunpack.c.l.b16 %v457
      %s462 = scalar_lea.vmem %s1, 192
      %v463 = vld [vmem:[%s462] sm:$0xf]
      %v464 = vld [vmem:[%s462 + $0x4] sm:$0xf]
      %v465 = vld [vmem:[%s462 + $0x8] sm:$0xf]
      %v466 = vld [vmem:[%s462 + $0xc] sm:$0xf]
      %v467 = vld [vmem:[%s462 + $0x10] sm:$0xf]
      %v468 = vld [vmem:[%s462 + $0x14] sm:$0xf]
      %v469 = vld [vmem:[%s462 + $0x18] sm:$0xf]
      %v470 = vld [vmem:[%s462 + $0x1c] sm:$0xf]
      %v471 = vld [vmem:[%s462 + $0x20] sm:$0xf]
      %v472 = vld [vmem:[%s462 + $0x24] sm:$0xf]
      %v473 = vld [vmem:[%s462 + $0x28] sm:$0xf]
      %v474 = vld [vmem:[%s462 + $0x2c] sm:$0xf]
      %v475 = vld [vmem:[%s462 + $0x30] sm:$0xf]
      %v476 = vld [vmem:[%s462 + $0x34] sm:$0xf]
      %v477 = vld [vmem:[%s462 + $0x38] sm:$0xf]
      %v478 = vld [vmem:[%s462 + $0x3c] sm:$0xf]
      %v479 = vld [vmem:[%s462 + $0x40] sm:$0xf]
      %v480 = vld [vmem:[%s462 + $0x44] sm:$0xf]
      %v481 = vld [vmem:[%s462 + $0x48] sm:$0xf]
      %v482 = vld [vmem:[%s462 + $0x4c] sm:$0xf]
      %v483 = vld [vmem:[%s462 + $0x50] sm:$0xf]
      %v484 = vld [vmem:[%s462 + $0x54] sm:$0xf]
      %v485 = vld [vmem:[%s462 + $0x58] sm:$0xf]
      %v486 = vld [vmem:[%s462 + $0x5c] sm:$0xf]
      %v487 = vld [vmem:[%s462 + $0x60] sm:$0xf]
      %v488 = vld [vmem:[%s462 + $0x64] sm:$0xf]
      %v489 = vld [vmem:[%s462 + $0x68] sm:$0xf]
      %v490 = vld [vmem:[%s462 + $0x6c] sm:$0xf]
      %v491 = vld [vmem:[%s462 + $0x70] sm:$0xf]
      %v492 = vld [vmem:[%s462 + $0x74] sm:$0xf]
      %v493 = vld [vmem:[%s462 + $0x78] sm:$0xf]
      %v494 = vld [vmem:[%s462 + $0x7c] sm:$0xf]
      %v495 = vld [vmem:[%s462 + $0x80] sm:$0xf]
      %v496 = vld [vmem:[%s462 + $0x84] sm:$0xf]
      %v497 = vld [vmem:[%s462 + $0x88] sm:$0xf]
      %v498 = vld [vmem:[%s462 + $0x8c] sm:$0xf]
      %v499 = vld [vmem:[%s462 + $0x90] sm:$0xf]
      %v500 = vld [vmem:[%s462 + $0x94] sm:$0xf]
      %v501 = vld [vmem:[%s462 + $0x98] sm:$0xf]
      %v502 = vld [vmem:[%s462 + $0x9c] sm:$0xf]
      %v503 = vld [vmem:[%s462 + $0xa0] sm:$0xf]
      %v504 = vld [vmem:[%s462 + $0xa4] sm:$0xf]
      %v505 = vld [vmem:[%s462 + $0xa8] sm:$0xf]
      %v506 = vld [vmem:[%s462 + $0xac] sm:$0xf]
      %v507 = vld [vmem:[%s462 + $0xb0] sm:$0xf]
      %v508 = vld [vmem:[%s462 + $0xb4] sm:$0xf]
      %v509 = vld [vmem:[%s462 + $0xb8] sm:$0xf]
      %v510 = vld [vmem:[%s462 + $0xbc] sm:$0xf]
      %v511 = vpack.c.b16 %v412, %v410
      %v512 = vpack.c.b16 %v413, %v411
      %v513 = vpack.c.b16 %v459, %v458
      %v514 = vpack.c.b16 %v416, %v414
      %v515 = vpack.c.b16 %v417, %v415
      %v516 = vpack.c.b16 %v461, %v460
      %v571 = vunpack.c.l.b16 %v463
      %v572 = vunpack.c.l.b16 %v464
      %v573 = vunpack.c.l.b16 %v465
      %v574 = vunpack.c.l.b16 %v466
      %v575 = vunpack.c.l.b16 %v467
      %v576 = vunpack.c.l.b16 %v468
      %v577 = vunpack.c.l.b16 %v469
      %v578 = vunpack.c.l.b16 %v470
      %v579 = vunpack.c.l.b16 %v471
      %v580 = vunpack.c.l.b16 %v472
      %v581 = vunpack.c.l.b16 %v473
      %v582 = vunpack.c.l.b16 %v474
      %v583 = vunpack.c.l.b16 %v475
      %v584 = vunpack.c.l.b16 %v476
      %v585 = vunpack.c.l.b16 %v477
      %v586 = vunpack.c.l.b16 %v478
      %v587 = vunpack.c.l.b16 %v479
      %v588 = vunpack.c.l.b16 %v480
      %v589 = vunpack.c.l.b16 %v481
      %v590 = vunpack.c.l.b16 %v482
      %v591 = vunpack.c.l.b16 %v483
      %v592 = vunpack.c.l.b16 %v484
      %v593 = vunpack.c.l.b16 %v485
      %v594 = vunpack.c.l.b16 %v486
      %v595 = vunpack.c.l.b16 %v487
      %v596 = vunpack.c.l.b16 %v488
      %v597 = vunpack.c.l.b16 %v489
      %v598 = vunpack.c.l.b16 %v490
      %v599 = vunpack.c.l.b16 %v491
      %v600 = vunpack.c.l.b16 %v492
      %v601 = vunpack.c.l.b16 %v493
      %v602 = vunpack.c.l.b16 %v494
      %v603 = vunpack.c.l.b16 %v495
      %v604 = vunpack.c.l.b16 %v496
      %v605 = vunpack.c.l.b16 %v497
      %v606 = vunpack.c.l.b16 %v498
      %v607 = vunpack.c.l.b16 %v499
      %v608 = vunpack.c.l.b16 %v500
      %v609 = vunpack.c.l.b16 %v501
      %v610 = vunpack.c.l.b16 %v502
      %v611 = vunpack.c.l.b16 %v503
      %v612 = vunpack.c.l.b16 %v504
      %v613 = vunpack.c.l.b16 %v505
      %v614 = vunpack.c.l.b16 %v506
      %v615 = vunpack.c.l.b16 %v507
      %v616 = vunpack.c.l.b16 %v508
      %v617 = vunpack.c.l.b16 %v509
      %v618 = vunpack.c.l.b16 %v510
      %v619 = vpack.c.b16 %v572, %v571
      %v620 = vpack.c.b16 %v574, %v573
      %v621 = vpack.c.b16 %v576, %v575
      %v622 = vpack.c.b16 %v578, %v577
      %v623 = vpack.c.b16 %v580, %v579
      %v624 = vpack.c.b16 %v582, %v581
      %v625 = vpack.c.b16 %v584, %v583
      %v626 = vpack.c.b16 %v586, %v585
      %v627 = vpack.c.b16 %v588, %v587
      %v628 = vpack.c.b16 %v590, %v589
      %v629 = vpack.c.b16 %v592, %v591
      %v630 = vpack.c.b16 %v594, %v593
      %v631 = vpack.c.b16 %v596, %v595
      %v632 = vpack.c.b16 %v598, %v597
      %v633 = vpack.c.b16 %v600, %v599
      %v634 = vpack.c.b16 %v602, %v601
      %v635 = vpack.c.b16 %v604, %v603
      %v636 = vpack.c.b16 %v606, %v605
      %v637 = vpack.c.b16 %v608, %v607
      %v638 = vpack.c.b16 %v610, %v609
      %v639 = vpack.c.b16 %v612, %v611
      %v640 = vpack.c.b16 %v614, %v613
      %v641 = vpack.c.b16 %v616, %v615
      %v642 = vpack.c.b16 %v618, %v617
      %667 = vmatprep.subr.bf16.mxu0 0
      %668 = vmatpush1.bf16.msra.mxu0 %v619
      %669 = vmatprep.subr.bf16.mxu0 0
      %670 = vmatpush1.bf16.msra.mxu0 %v620
      %671 = vmatprep.subr.bf16.mxu0 0
      %672 = vmatpush1.bf16.msra.mxu0 %v621
      %673 = vmatprep.subr.bf16.mxu0 0
      %674 = vmatpush1.bf16.msra.mxu0 %v622
      %675 = vmatprep.subr.bf16.mxu0 0
      %676 = vmatpush1.bf16.msra.mxu0 %v623
      %677 = vmatprep.subr.bf16.mxu0 0
      %678 = vmatpush1.bf16.msra.mxu0 %v624
      %679 = vmatprep.subr.bf16.mxu0 0
      %680 = vmatpush1.bf16.msra.mxu0 %v625
      %681 = vmatprep.subr.bf16.mxu0 0
      %682 = vmatpush1.bf16.msra.mxu0 %v626
      %683 = vmatprep.subr.bf16.mxu0 0
      %684 = vmatpush1.bf16.msra.mxu0 %v627
      %685 = vmatprep.subr.bf16.mxu0 0
      %686 = vmatpush1.bf16.msra.mxu0 %v628
      %687 = vmatprep.subr.bf16.mxu0 0
      %688 = vmatpush1.bf16.msra.mxu0 %v629
      %689 = vmatprep.subr.bf16.mxu0 0
      %690 = vmatpush1.bf16.msra.mxu0 %v630
      %691 = vmatprep.subr.bf16.mxu0 0
      %692 = vmatpush1.bf16.msra.mxu0 %v631
      %693 = vmatprep.subr.bf16.mxu0 0
      %694 = vmatpush1.bf16.msra.mxu0 %v632
      %695 = vmatprep.subr.bf16.mxu0 0
      %696 = vmatpush1.bf16.msra.mxu0 %v633
      %697 = vmatprep.subr.bf16.mxu0 0
      %698 = vmatpush1.bf16.msra.mxu0 %v634
      %699 = vmatprep.mubr.bf16.mxu0 %v512
      %700 = vmatmul.mubr.bf16.gmra.mrb[0].mxu0 %v511
      %v701 = vpop.f32.mrb[0].mxu0
      %v702 = vadd.f32 0.0, %v701
      %v703 = vpop.f32.mrb[0].mxu0
      %v704 = vpop.f32.mrb[0].mxu0
      %v705 = vadd.f32 0.0, %v704
      %v706 = vpop.f32.mrb[0].mxu0
      %707 = vmatprep.mubr.bf16.mxu0 %v515
      %708 = vmatmul.mubr.bf16.gmra.mrb[0].mxu0 %v514
      %v709 = vpop.f32.mrb[0].mxu0
      %v710 = vadd.f32 0.0, %v709
      %v711 = vpop.f32.mrb[0].mxu0
      %v712 = vpop.f32.mrb[0].mxu0
      %v713 = vadd.f32 0.0, %v712
      %v714 = vpop.f32.mrb[0].mxu0
      %715 = vdwg.mxu0
      %716 = vmatprep.subr.bf16.mxu0 0
      %717 = vmatpush1.bf16.msra.mxu0 %v635
      %718 = vmatprep.subr.bf16.mxu0 0
      %719 = vmatpush1.bf16.msra.mxu0 %v636
      %720 = vmatprep.subr.bf16.mxu0 0
      %721 = vmatpush1.bf16.msra.mxu0 %v637
      %722 = vmatprep.subr.bf16.mxu0 0
      %723 = vmatpush1.bf16.msra.mxu0 %v638
      %724 = vmatprep.subr.bf16.mxu0 0
      %725 = vmatpush1.bf16.msra.mxu0 %v639
      %726 = vmatprep.subr.bf16.mxu0 0
      %727 = vmatpush1.bf16.msra.mxu0 %v640
      %728 = vmatprep.subr.bf16.mxu0 0
      %729 = vmatpush1.bf16.msra.mxu0 %v641
      %730 = vmatprep.subr.bf16.mxu0 0
      %731 = vmatpush1.bf16.msra.mxu0 %v642
      %732 = vmatprep.subr.bf16.mxu0 0
      %733 = vmatpush1.bf16.msra.mxu0 0
      %734 = vmatprep.subr.bf16.mxu0 0
      %735 = vmatpush1.bf16.msra.mxu0 0
      %736 = vmatprep.subr.bf16.mxu0 0
      %737 = vmatpush1.bf16.msra.mxu0 0
      %738 = vmatprep.subr.bf16.mxu0 0
      %739 = vmatpush1.bf16.msra.mxu0 0
      %740 = vmatprep.subr.bf16.mxu0 0
      %741 = vmatpush1.bf16.msra.mxu0 0
      %742 = vmatprep.subr.bf16.mxu0 0
      %743 = vmatpush1.bf16.msra.mxu0 0
      %744 = vmatprep.subr.bf16.mxu0 0
      %745 = vmatpush1.bf16.msra.mxu0 0
      %746 = vmatprep.subr.bf16.mxu0 0
      %747 = vmatpush1.bf16.msra.mxu0 0
      %748 = vmatprep.mubr.bf16.mxu0 0
      %749 = vmatmul.mubr.bf16.gmra.mrb[0].mxu0 %v513
      %v750 = vpop.f32.mrb[0].mxu0
      %v751 = vadd.f32 %v702, %v750
      %v752 = vpop.f32.mrb[0].mxu0
      %v753 = vpop.f32.mrb[0].mxu0
      %v754 = vadd.f32 %v705, %v753
      %v755 = vpop.f32.mrb[0].mxu0
      %756 = vmatprep.mubr.bf16.mxu0 0
      %757 = vmatmul.mubr.bf16.gmra.mrb[0].mxu0 %v516
      %v758 = vpop.f32.mrb[0].mxu0
      %v759 = vadd.f32 %v710, %v758
      %v760 = vpop.f32.mrb[0].mxu0
      %v761 = vpop.f32.mrb[0].mxu0
      %v762 = vadd.f32 %v713, %v761
      %v763 = vpop.f32.mrb[0].mxu0
      %764 = vdwg.mxu0
      %v765 = vpack.c.b16 %v308, %v306
      %v766 = vpack.c.b16 %v309, %v307
      %v767 = vpack.c.b16 %v355, %v354
      %v768 = vpack.c.b16 %v312, %v310
      %v769 = vpack.c.b16 %v313, %v311
      %v770 = vpack.c.b16 %v357, %v356
      %v825 = vunpack.c.l.b16 %v358
      %v826 = vunpack.c.l.b16 %v359
      %v827 = vunpack.c.l.b16 %v360
      %v828 = vunpack.c.l.b16 %v361
      %v829 = vunpack.c.l.b16 %v362
      %v830 = vunpack.c.l.b16 %v363
      %v831 = vunpack.c.l.b16 %v364
      %v832 = vunpack.c.l.b16 %v365
      %v833 = vunpack.c.l.b16 %v366
      %v834 = vunpack.c.l.b16 %v367
      %v835 = vunpack.c.l.b16 %v368
      %v836 = vunpack.c.l.b16 %v369
      %v837 = vunpack.c.l.b16 %v370
      %v838 = vunpack.c.l.b16 %v371
      %v839 = vunpack.c.l.b16 %v372
      %v840 = vunpack.c.l.b16 %v373
      %v841 = vunpack.c.l.b16 %v374
      %v842 = vunpack.c.l.b16 %v375
      %v843 = vunpack.c.l.b16 %v376
      %v844 = vunpack.c.l.b16 %v377
      %v845 = vunpack.c.l.b16 %v378
      %v846 = vunpack.c.l.b16 %v379
      %v847 = vunpack.c.l.b16 %v380
      %v848 = vunpack.c.l.b16 %v381
      %v849 = vunpack.c.l.b16 %v382
      %v850 = vunpack.c.l.b16 %v383
      %v851 = vunpack.c.l.b16 %v384
      %v852 = vunpack.c.l.b16 %v385
      %v853 = vunpack.c.l.b16 %v386
      %v854 = vunpack.c.l.b16 %v387
      %v855 = vunpack.c.l.b16 %v388
      %v856 = vunpack.c.l.b16 %v389
      %v857 = vunpack.c.l.b16 %v390
      %v858 = vunpack.c.l.b16 %v391
      %v859 = vunpack.c.l.b16 %v392
      %v860 = vunpack.c.l.b16 %v393
      %v861 = vunpack.c.l.b16 %v394
      %v862 = vunpack.c.l.b16 %v395
      %v863 = vunpack.c.l.b16 %v396
      %v864 = vunpack.c.l.b16 %v397
      %v865 = vunpack.c.l.b16 %v398
      %v866 = vunpack.c.l.b16 %v399
      %v867 = vunpack.c.l.b16 %v400
      %v868 = vunpack.c.l.b16 %v401
      %v869 = vunpack.c.l.b16 %v402
      %v870 = vunpack.c.l.b16 %v403
      %v871 = vunpack.c.l.b16 %v404
      %v872 = vunpack.c.l.b16 %v405
      %v873 = vpack.c.b16 %v826, %v825
      %v874 = vpack.c.b16 %v828, %v827
      %v875 = vpack.c.b16 %v830, %v829
      %v876 = vpack.c.b16 %v832, %v831
      %v877 = vpack.c.b16 %v834, %v833
      %v878 = vpack.c.b16 %v836, %v835
      %v879 = vpack.c.b16 %v838, %v837
      %v880 = vpack.c.b16 %v840, %v839
      %v881 = vpack.c.b16 %v842, %v841
      %v882 = vpack.c.b16 %v844, %v843
      %v883 = vpack.c.b16 %v846, %v845
      %v884 = vpack.c.b16 %v848, %v847
      %v885 = vpack.c.b16 %v850, %v849
      %v886 = vpack.c.b16 %v852, %v851
      %v887 = vpack.c.b16 %v854, %v853
      %v888 = vpack.c.b16 %v856, %v855
      %v889 = vpack.c.b16 %v858, %v857
      %v890 = vpack.c.b16 %v860, %v859
      %v891 = vpack.c.b16 %v862, %v861
      %v892 = vpack.c.b16 %v864, %v863
      %v893 = vpack.c.b16 %v866, %v865
      %v894 = vpack.c.b16 %v868, %v867
      %v895 = vpack.c.b16 %v870, %v869
      %v896 = vpack.c.b16 %v872, %v871
      %921 = vmatprep.subr.bf16.mxu0 0
      %922 = vmatpush1.bf16.msra.mxu0 %v873
      %923 = vmatprep.subr.bf16.mxu0 0
      %924 = vmatpush1.bf16.msra.mxu0 %v874
      %925 = vmatprep.subr.bf16.mxu0 0
      %926 = vmatpush1.bf16.msra.mxu0 %v875
      %927 = vmatprep.subr.bf16.mxu0 0
      %928 = vmatpush1.bf16.msra.mxu0 %v876
      %929 = vmatprep.subr.bf16.mxu0 0
      %930 = vmatpush1.bf16.msra.mxu0 %v877
      %931 = vmatprep.subr.bf16.mxu0 0
      %932 = vmatpush1.bf16.msra.mxu0 %v878
      %933 = vmatprep.subr.bf16.mxu0 0
      %934 = vmatpush1.bf16.msra.mxu0 %v879
      %935 = vmatprep.subr.bf16.mxu0 0
      %936 = vmatpush1.bf16.msra.mxu0 %v880
      %937 = vmatprep.subr.bf16.mxu0 0
      %938 = vmatpush1.bf16.msra.mxu0 %v881
      %939 = vmatprep.subr.bf16.mxu0 0
      %940 = vmatpush1.bf16.msra.mxu0 %v882
      %941 = vmatprep.subr.bf16.mxu0 0
      %942 = vmatpush1.bf16.msra.mxu0 %v883
      %943 = vmatprep.subr.bf16.mxu0 0
      %944 = vmatpush1.bf16.msra.mxu0 %v884
      %945 = vmatprep.subr.bf16.mxu0 0
      %946 = vmatpush1.bf16.msra.mxu0 %v885
      %947 = vmatprep.subr.bf16.mxu0 0
      %948 = vmatpush1.bf16.msra.mxu0 %v886
      %949 = vmatprep.subr.bf16.mxu0 0
      %950 = vmatpush1.bf16.msra.mxu0 %v887
      %951 = vmatprep.subr.bf16.mxu0 0
      %952 = vmatpush1.bf16.msra.mxu0 %v888
      %953 = vmatprep.mubr.bf16.mxu0 %v766
      %954 = vmatmul.mubr.bf16.gmra.mrb[0].mxu0 %v765
      %v955 = vpop.f32.mrb[0].mxu0
      %v956 = vadd.f32 %v751, %v955
      %v957 = vpop.f32.mrb[0].mxu0
      %v958 = vpop.f32.mrb[0].mxu0
      %v959 = vadd.f32 %v754, %v958
      %v960 = vpop.f32.mrb[0].mxu0
      %961 = vmatprep.mubr.bf16.mxu0 %v769
      %962 = vmatmul.mubr.bf16.gmra.mrb[0].mxu0 %v768
      %v963 = vpop.f32.mrb[0].mxu0
      %v964 = vadd.f32 %v759, %v963
      %v965 = vpop.f32.mrb[0].mxu0
      %v966 = vpop.f32.mrb[0].mxu0
      %v967 = vadd.f32 %v762, %v966
      %v968 = vpop.f32.mrb[0].mxu0
      %969 = vdwg.mxu0
      %970 = vmatprep.subr.bf16.mxu0 0
      %971 = vmatpush1.bf16.msra.mxu0 %v889
      %972 = vmatprep.subr.bf16.mxu0 0
      %973 = vmatpush1.bf16.msra.mxu0 %v890
      %974 = vmatprep.subr.bf16.mxu0 0
      %975 = vmatpush1.bf16.msra.mxu0 %v891
      %976 = vmatprep.subr.bf16.mxu0 0
      %977 = vmatpush1.bf16.msra.mxu0 %v892
      %978 = vmatprep.subr.bf16.mxu0 0
      %979 = vmatpush1.bf16.msra.mxu0 %v893
      %980 = vmatprep.subr.bf16.mxu0 0
      %981 = vmatpush1.bf16.msra.mxu0 %v894
      %982 = vmatprep.subr.bf16.mxu0 0
      %983 = vmatpush1.bf16.msra.mxu0 %v895
      %984 = vmatprep.subr.bf16.mxu0 0
      %985 = vmatpush1.bf16.msra.mxu0 %v896
      %986 = vmatprep.subr.bf16.mxu0 0
      %987 = vmatpush1.bf16.msra.mxu0 0
      %988 = vmatprep.subr.bf16.mxu0 0
      %989 = vmatpush1.bf16.msra.mxu0 0
      %990 = vmatprep.subr.bf16.mxu0 0
      %991 = vmatpush1.bf16.msra.mxu0 0
      %992 = vmatprep.subr.bf16.mxu0 0
      %993 = vmatpush1.bf16.msra.mxu0 0
      %994 = vmatprep.subr.bf16.mxu0 0
      %995 = vmatpush1.bf16.msra.mxu0 0
      %996 = vmatprep.subr.bf16.mxu0 0
      %997 = vmatpush1.bf16.msra.mxu0 0
      %998 = vmatprep.subr.bf16.mxu0 0
      %999 = vmatpush1.bf16.msra.mxu0 0
      %1000 = vmatprep.subr.bf16.mxu0 0
      %1001 = vmatpush1.bf16.msra.mxu0 0
      %1002 = vmatprep.mubr.bf16.mxu0 0
      %1003 = vmatmul.mubr.bf16.gmra.mrb[0].mxu0 %v767
      %v1004 = vpop.f32.mrb[0].mxu0
      %v1005 = vadd.f32 %v956, %v1004
      %v1006 = vpop.f32.mrb[0].mxu0
      %v1007 = vpop.f32.mrb[0].mxu0
      %v1008 = vadd.f32 %v959, %v1007
      %v1009 = vpop.f32.mrb[0].mxu0
      %1010 = vmatprep.mubr.bf16.mxu0 0
      %1011 = vmatmul.mubr.bf16.gmra.mrb[0].mxu0 %v770
      %v1012 = vpop.f32.mrb[0].mxu0
      %v1013 = vadd.f32 %v964, %v1012
      %v1014 = vpop.f32.mrb[0].mxu0
      %v1015 = vpop.f32.mrb[0].mxu0
      %v1016 = vadd.f32 %v967, %v1015
      %v1017 = vpop.f32.mrb[0].mxu0
      %1018 = vdwg.mxu0
      %v1023 = vunpack.c.l.b16 %v294
      %v1024 = vunpack.c.h.b16 %v294
      %v1025 = vunpack.c.l.b16 %v296
      %v1026 = vunpack.c.h.b16 %v296
      %v1027 = vunpack.c.l.b16 %v298
      %v1028 = vunpack.c.h.b16 %v298
      %v1029 = vunpack.c.l.b16 %v300
      %v1030 = vunpack.c.h.b16 %v300
      %v1035 = vunpack.c.l.b16 %v295
      %v1036 = vunpack.c.l.b16 %v297
      %v1037 = vunpack.c.l.b16 %v299
      %v1038 = vunpack.c.l.b16 %v301
      %v1039 = vpack.c.b16 %v1035, %v1023
      %v1040 = vpack.c.b16 %v1036, %v1025
      %v1041 = vpack.c.b16 %v1037, %v1027
      %v1042 = vpack.c.b16 %v1038, %v1029
      %v1044 = vshrl.u32 %v1039, 16
      %v1046 = vshll.u32 %v1039, 16
      %v1048 = vrot.slane %v1046, 1
      %v1049 = vor.u32 %v1044, %v1048
      %v1051 = vshrl.u32 %v1040, 16
      %v1053 = vshll.u32 %v1040, 16
      %v1055 = vrot.slane %v1053, 1
      %v1056 = vor.u32 %v1051, %v1055
      %v1058 = vshrl.u32 %v1041, 16
      %v1060 = vshll.u32 %v1041, 16
      %v1062 = vrot.slane %v1060, 1
      %v1063 = vor.u32 %v1058, %v1062
      %v1065 = vshrl.u32 %v1042, 16
      %v1067 = vshll.u32 %v1042, 16
      %v1069 = vrot.slane %v1067, 1
      %v1070 = vor.u32 %v1065, %v1069
      %v1071 = vunpack.c.l.b16 %v1049
      %v1072 = vunpack.c.l.b16 %v1056
      %v1073 = vunpack.c.l.b16 %v1063
      %v1074 = vunpack.c.l.b16 %v1070
      %s1075 = scalar_lea.vmem %s1, 384
      %v1076 = vld [vmem:[%s1075] sm:$0xf]
      %v1077 = vld [vmem:[%s1075 + $0x4] sm:$0xf]
      %v1078 = vld [vmem:[%s1075 + $0x8] sm:$0xf]
      %v1079 = vld [vmem:[%s1075 + $0xc] sm:$0xf]
      %v1080 = vld [vmem:[%s1075 + $0x10] sm:$0xf]
      %v1081 = vld [vmem:[%s1075 + $0x14] sm:$0xf]
      %v1082 = vld [vmem:[%s1075 + $0x18] sm:$0xf]
      %v1083 = vld [vmem:[%s1075 + $0x1c] sm:$0xf]
      %v1084 = vld [vmem:[%s1075 + $0x20] sm:$0xf]
      %v1085 = vld [vmem:[%s1075 + $0x24] sm:$0xf]
      %v1086 = vld [vmem:[%s1075 + $0x28] sm:$0xf]
      %v1087 = vld [vmem:[%s1075 + $0x2c] sm:$0xf]
      %v1088 = vld [vmem:[%s1075 + $0x30] sm:$0xf]
      %v1089 = vld [vmem:[%s1075 + $0x34] sm:$0xf]
      %v1090 = vld [vmem:[%s1075 + $0x38] sm:$0xf]
      %v1091 = vld [vmem:[%s1075 + $0x3c] sm:$0xf]
      %v1092 = vld [vmem:[%s1075 + $0x40] sm:$0xf]
      %v1093 = vld [vmem:[%s1075 + $0x44] sm:$0xf]
      %v1094 = vld [vmem:[%s1075 + $0x48] sm:$0xf]
      %v1095 = vld [vmem:[%s1075 + $0x4c] sm:$0xf]
      %v1096 = vld [vmem:[%s1075 + $0x50] sm:$0xf]
      %v1097 = vld [vmem:[%s1075 + $0x54] sm:$0xf]
      %v1098 = vld [vmem:[%s1075 + $0x58] sm:$0xf]
      %v1099 = vld [vmem:[%s1075 + $0x5c] sm:$0xf]
      %v1100 = vld [vmem:[%s1075 + $0x60] sm:$0xf]
      %v1101 = vld [vmem:[%s1075 + $0x64] sm:$0xf]
      %v1102 = vld [vmem:[%s1075 + $0x68] sm:$0xf]
      %v1103 = vld [vmem:[%s1075 + $0x6c] sm:$0xf]
      %v1104 = vld [vmem:[%s1075 + $0x70] sm:$0xf]
      %v1105 = vld [vmem:[%s1075 + $0x74] sm:$0xf]
      %v1106 = vld [vmem:[%s1075 + $0x78] sm:$0xf]
      %v1107 = vld [vmem:[%s1075 + $0x7c] sm:$0xf]
      %v1108 = vld [vmem:[%s1075 + $0x80] sm:$0xf]
      %v1109 = vld [vmem:[%s1075 + $0x84] sm:$0xf]
      %v1110 = vld [vmem:[%s1075 + $0x88] sm:$0xf]
      %v1111 = vld [vmem:[%s1075 + $0x8c] sm:$0xf]
      %v1112 = vld [vmem:[%s1075 + $0x90] sm:$0xf]
      %v1113 = vld [vmem:[%s1075 + $0x94] sm:$0xf]
      %v1114 = vld [vmem:[%s1075 + $0x98] sm:$0xf]
      %v1115 = vld [vmem:[%s1075 + $0x9c] sm:$0xf]
      %v1116 = vld [vmem:[%s1075 + $0xa0] sm:$0xf]
      %v1117 = vld [vmem:[%s1075 + $0xa4] sm:$0xf]
      %v1118 = vld [vmem:[%s1075 + $0xa8] sm:$0xf]
      %v1119 = vld [vmem:[%s1075 + $0xac] sm:$0xf]
      %v1120 = vld [vmem:[%s1075 + $0xb0] sm:$0xf]
      %v1121 = vld [vmem:[%s1075 + $0xb4] sm:$0xf]
      %v1122 = vld [vmem:[%s1075 + $0xb8] sm:$0xf]
      %v1123 = vld [vmem:[%s1075 + $0xbc] sm:$0xf]
      %v1124 = vpack.c.b16 %v1025, %v1023
      %v1125 = vpack.c.b16 %v1026, %v1024
      %v1126 = vpack.c.b16 %v1072, %v1071
      %v1127 = vpack.c.b16 %v1029, %v1027
      %v1128 = vpack.c.b16 %v1030, %v1028
      %v1129 = vpack.c.b16 %v1074, %v1073
      %v1184 = vunpack.c.l.b16 %v1076
      %v1185 = vunpack.c.l.b16 %v1077
      %v1186 = vunpack.c.l.b16 %v1078
      %v1187 = vunpack.c.l.b16 %v1079
      %v1188 = vunpack.c.l.b16 %v1080
      %v1189 = vunpack.c.l.b16 %v1081
      %v1190 = vunpack.c.l.b16 %v1082
      %v1191 = vunpack.c.l.b16 %v1083
      %v1192 = vunpack.c.l.b16 %v1084
      %v1193 = vunpack.c.l.b16 %v1085
      %v1194 = vunpack.c.l.b16 %v1086
      %v1195 = vunpack.c.l.b16 %v1087
      %v1196 = vunpack.c.l.b16 %v1088
      %v1197 = vunpack.c.l.b16 %v1089
      %v1198 = vunpack.c.l.b16 %v1090
      %v1199 = vunpack.c.l.b16 %v1091
      %v1200 = vunpack.c.l.b16 %v1092
      %v1201 = vunpack.c.l.b16 %v1093
      %v1202 = vunpack.c.l.b16 %v1094
      %v1203 = vunpack.c.l.b16 %v1095
      %v1204 = vunpack.c.l.b16 %v1096
      %v1205 = vunpack.c.l.b16 %v1097
      %v1206 = vunpack.c.l.b16 %v1098
      %v1207 = vunpack.c.l.b16 %v1099
      %v1208 = vunpack.c.l.b16 %v1100
      %v1209 = vunpack.c.l.b16 %v1101
      %v1210 = vunpack.c.l.b16 %v1102
      %v1211 = vunpack.c.l.b16 %v1103
      %v1212 = vunpack.c.l.b16 %v1104
      %v1213 = vunpack.c.l.b16 %v1105
      %v1214 = vunpack.c.l.b16 %v1106
      %v1215 = vunpack.c.l.b16 %v1107
      %v1216 = vunpack.c.l.b16 %v1108
      %v1217 = vunpack.c.l.b16 %v1109
      %v1218 = vunpack.c.l.b16 %v1110
      %v1219 = vunpack.c.l.b16 %v1111
      %v1220 = vunpack.c.l.b16 %v1112
      %v1221 = vunpack.c.l.b16 %v1113
      %v1222 = vunpack.c.l.b16 %v1114
      %v1223 = vunpack.c.l.b16 %v1115
      %v1224 = vunpack.c.l.b16 %v1116
      %v1225 = vunpack.c.l.b16 %v1117
      %v1226 = vunpack.c.l.b16 %v1118
      %v1227 = vunpack.c.l.b16 %v1119
      %v1228 = vunpack.c.l.b16 %v1120
      %v1229 = vunpack.c.l.b16 %v1121
      %v1230 = vunpack.c.l.b16 %v1122
      %v1231 = vunpack.c.l.b16 %v1123
      %v1232 = vpack.c.b16 %v1185, %v1184
      %v1233 = vpack.c.b16 %v1187, %v1186
      %v1234 = vpack.c.b16 %v1189, %v1188
      %v1235 = vpack.c.b16 %v1191, %v1190
      %v1236 = vpack.c.b16 %v1193, %v1192
      %v1237 = vpack.c.b16 %v1195, %v1194
      %v1238 = vpack.c.b16 %v1197, %v1196
      %v1239 = vpack.c.b16 %v1199, %v1198
      %v1240 = vpack.c.b16 %v1201, %v1200
      %v1241 = vpack.c.b16 %v1203, %v1202
      %v1242 = vpack.c.b16 %v1205, %v1204
      %v1243 = vpack.c.b16 %v1207, %v1206
      %v1244 = vpack.c.b16 %v1209, %v1208
      %v1245 = vpack.c.b16 %v1211, %v1210
      %v1246 = vpack.c.b16 %v1213, %v1212
      %v1247 = vpack.c.b16 %v1215, %v1214
      %v1248 = vpack.c.b16 %v1217, %v1216
      %v1249 = vpack.c.b16 %v1219, %v1218
      %v1250 = vpack.c.b16 %v1221, %v1220
      %v1251 = vpack.c.b16 %v1223, %v1222
      %v1252 = vpack.c.b16 %v1225, %v1224
      %v1253 = vpack.c.b16 %v1227, %v1226
      %v1254 = vpack.c.b16 %v1229, %v1228
      %v1255 = vpack.c.b16 %v1231, %v1230
      %1280 = vmatprep.subr.bf16.mxu0 0
      %1281 = vmatpush1.bf16.msra.mxu0 %v1232
      %1282 = vmatprep.subr.bf16.mxu0 0
      %1283 = vmatpush1.bf16.msra.mxu0 %v1233
      %1284 = vmatprep.subr.bf16.mxu0 0
      %1285 = vmatpush1.bf16.msra.mxu0 %v1234
      %1286 = vmatprep.subr.bf16.mxu0 0
      %1287 = vmatpush1.bf16.msra.mxu0 %v1235
      %1288 = vmatprep.subr.bf16.mxu0 0
      %1289 = vmatpush1.bf16.msra.mxu0 %v1236
      %1290 = vmatprep.subr.bf16.mxu0 0
      %1291 = vmatpush1.bf16.msra.mxu0 %v1237
      %1292 = vmatprep.subr.bf16.mxu0 0
      %1293 = vmatpush1.bf16.msra.mxu0 %v1238
      %1294 = vmatprep.subr.bf16.mxu0 0
      %1295 = vmatpush1.bf16.msra.mxu0 %v1239
      %1296 = vmatprep.subr.bf16.mxu0 0
      %1297 = vmatpush1.bf16.msra.mxu0 %v1240
      %1298 = vmatprep.subr.bf16.mxu0 0
      %1299 = vmatpush1.bf16.msra.mxu0 %v1241
      %1300 = vmatprep.subr.bf16.mxu0 0
      %1301 = vmatpush1.bf16.msra.mxu0 %v1242
      %1302 = vmatprep.subr.bf16.mxu0 0
      %1303 = vmatpush1.bf16.msra.mxu0 %v1243
      %1304 = vmatprep.subr.bf16.mxu0 0
      %1305 = vmatpush1.bf16.msra.mxu0 %v1244
      %1306 = vmatprep.subr.bf16.mxu0 0
      %1307 = vmatpush1.bf16.msra.mxu0 %v1245
      %1308 = vmatprep.subr.bf16.mxu0 0
      %1309 = vmatpush1.bf16.msra.mxu0 %v1246
      %1310 = vmatprep.subr.bf16.mxu0 0
      %1311 = vmatpush1.bf16.msra.mxu0 %v1247
      %1312 = vmatprep.mubr.bf16.mxu0 %v1125
      %1313 = vmatmul.mubr.bf16.gmra.mrb[0].mxu0 %v1124
      %v1314 = vpop.f32.mrb[0].mxu0
      %v1315 = vadd.f32 0.0, %v1314
      %v1316 = vpop.f32.mrb[0].mxu0
      %v1317 = vpop.f32.mrb[0].mxu0
      %v1318 = vadd.f32 0.0, %v1317
      %v1319 = vpop.f32.mrb[0].mxu0
      %1320 = vmatprep.mubr.bf16.mxu0 %v1128
      %1321 = vmatmul.mubr.bf16.gmra.mrb[0].mxu0 %v1127
      %v1322 = vpop.f32.mrb[0].mxu0
      %v1323 = vadd.f32 0.0, %v1322
      %v1324 = vpop.f32.mrb[0].mxu0
      %v1325 = vpop.f32.mrb[0].mxu0
      %v1326 = vadd.f32 0.0, %v1325
      %v1327 = vpop.f32.mrb[0].mxu0
      %1328 = vdwg.mxu0
      %1329 = vmatprep.subr.bf16.mxu0 0
      %1330 = vmatpush1.bf16.msra.mxu0 %v1248
      %1331 = vmatprep.subr.bf16.mxu0 0
      %1332 = vmatpush1.bf16.msra.mxu0 %v1249
      %1333 = vmatprep.subr.bf16.mxu0 0
      %1334 = vmatpush1.bf16.msra.mxu0 %v1250
      %1335 = vmatprep.subr.bf16.mxu0 0
      %1336 = vmatpush1.bf16.msra.mxu0 %v1251
      %1337 = vmatprep.subr.bf16.mxu0 0
      %1338 = vmatpush1.bf16.msra.mxu0 %v1252
      %1339 = vmatprep.subr.bf16.mxu0 0
      %1340 = vmatpush1.bf16.msra.mxu0 %v1253
      %1341 = vmatprep.subr.bf16.mxu0 0
      %1342 = vmatpush1.bf16.msra.mxu0 %v1254
      %1343 = vmatprep.subr.bf16.mxu0 0
      %1344 = vmatpush1.bf16.msra.mxu0 %v1255
      %1345 = vmatprep.subr.bf16.mxu0 0
      %1346 = vmatpush1.bf16.msra.mxu0 0
      %1347 = vmatprep.subr.bf16.mxu0 0
      %1348 = vmatpush1.bf16.msra.mxu0 0
      %1349 = vmatprep.subr.bf16.mxu0 0
      %1350 = vmatpush1.bf16.msra.mxu0 0
      %1351 = vmatprep.subr.bf16.mxu0 0
      %1352 = vmatpush1.bf16.msra.mxu0 0
      %1353 = vmatprep.subr.bf16.mxu0 0
      %1354 = vmatpush1.bf16.msra.mxu0 0
      %1355 = vmatprep.subr.bf16.mxu0 0
      %1356 = vmatpush1.bf16.msra.mxu0 0
      %1357 = vmatprep.subr.bf16.mxu0 0
      %1358 = vmatpush1.bf16.msra.mxu0 0
      %1359 = vmatprep.subr.bf16.mxu0 0
      %1360 = vmatpush1.bf16.msra.mxu0 0
      %1361 = vmatprep.mubr.bf16.mxu0 0
      %1362 = vmatmul.mubr.bf16.gmra.mrb[0].mxu0 %v1126
      %v1363 = vpop.f32.mrb[0].mxu0
      %v1364 = vadd.f32 %v1315, %v1363
      %v1365 = vpop.f32.mrb[0].mxu0
      %v1366 = vpop.f32.mrb[0].mxu0
      %v1367 = vadd.f32 %v1318, %v1366
      %v1368 = vpop.f32.mrb[0].mxu0
      %1369 = vmatprep.mubr.bf16.mxu0 0
      %1370 = vmatmul.mubr.bf16.gmra.mrb[0].mxu0 %v1129
      %v1371 = vpop.f32.mrb[0].mxu0
      %v1372 = vadd.f32 %v1323, %v1371
      %v1373 = vpop.f32.mrb[0].mxu0
      %v1374 = vpop.f32.mrb[0].mxu0
      %v1375 = vadd.f32 %v1326, %v1374
      %v1376 = vpop.f32.mrb[0].mxu0
      %1377 = vdwg.mxu0
      %v1378 = vadd.f32 %v1005, %v1364
      %v1379 = vadd.f32 %v1008, %v1367
      %v1380 = vadd.f32 %v1013, %v1372
      %v1381 = vadd.f32 %v1016, %v1375
      %v1382 = vld [vmem:[%s2] sm:$0x1]
      %v1384 = vlaneseq
      %v1385 = vshrl.u32 %v1384, 7
      %v1386 = vsub.s32 0, %v1385
      %v1387 = vrot.slane %v1382, %v1386
      %v1389 = vmul.f32 %v1378, %v1387
      %v1390 = vmul.f32 %v1379, %v1387
      %v1391 = vmul.f32 %v1380, %v1387
      %v1392 = vmul.f32 %v1381, %v1387
      %v1393 = vld [vmem:[%s3] sm:$0x1]
      %v1395 = vlaneseq
      %v1396 = vshrl.u32 %v1395, 7
      %v1397 = vsub.s32 0, %v1396
      %v1398 = vrot.slane %v1393, %v1397
      %v1400 = vadd.f32 %v1389, %v1398
      %v1401 = vadd.f32 %v1390, %v1398
      %v1402 = vadd.f32 %v1391, %v1398
      %v1403 = vadd.f32 %v1392, %v1398
      %v1404 = vmax.f32 %v1400, 0.0
      %v1405 = vmax.f32 %v1401, 0.0
      %v1406 = vmax.f32 %v1402, 0.0
      %v1407 = vmax.f32 %v1403, 0.0
      %v1408 = vpack.c.bf16 %v1405, %v1404
      %v1409 = vpack.c.bf16 %v1407, %v1406
      %v1412 = vunpack.c.l.b16 %v1408
      %v1413 = vunpack.c.h.b16 %v1408
      %v1414 = vunpack.c.l.b16 %v1409
      %v1415 = vunpack.c.h.b16 %v1409
      %v1416 = vpack.c.b16 %v1412, %v1412
      %v1417 = vpack.c.b16 %v1413, %v1413
      %v1418 = vpack.c.b16 %v1414, %v1414
      %v1419 = vpack.c.b16 %v1415, %v1415
      %1424 = vst [vmem:[%s259] sm:$0xf] %v1416
      %1425 = vst [vmem:[%s259 + $0x4] sm:$0xf] %v1417
      %1426 = vst [vmem:[%s259 + $0x8] sm:$0xf] %v1418
      %1427 = vst [vmem:[%s259 + $0xc] sm:$0xf] %v1419
      %v1428 = vmax.f32 %v1404, %v1405
      %v1429 = vmax.f32 %v1406, %v1407
      %v1430 = vmax.f32 %v1428, %v1429
      %1431 = vst [vmem:[%s268] sm:$0xff] %v1430
      %s1432 = smul.u32 4, %s22
      %p1433 = scmp.lt.s32.totalorder %s21, 1
      %s1434 = scalar_select %p1433, %s21, 1
      %p1435 = scmp.lt.s32.totalorder %s1432, 7
      %s1436 = scalar_select %p1435, %s1432, 7
      %s1437 = smul.addr %s1434, 8
      %s1438 = sadd.s32 %s1436, %s1437
      %s1439 = smul.addr %s1438, 4
      %s1440 = scalar_lea.vmem %s4, %s1439
      %p1441 = scmp.lt.s32.totalorder %s21, 1
      %s1442 = scalar_select %p1441, %s21, 1
      %p1443 = scmp.lt.s32.totalorder %s22, 1
      %s1444 = scalar_select %p1443, %s22, 1
      %s1445 = smul.addr %s1442, 2
      %s1446 = sadd.s32 %s1444, %s1445
      %s1447 = smul.addr %s1446, 8
      %s1448 = scalar_lea.vmem %s5, %s1447
      // Predicated region
      $region37: #{_lambda_.4} parent=35 // pred_check
        %p1449 = pneg %p138
      $region38: #{_lambda_.4} parent=35 // pred_check_branch
        %1451 = sbr.rel (%p1449) target = $region40
      $region39: #{_lambda_.4} parent=35 // pred_region
        %s1452 = smul.u32 4, %s22
      $region40: #{_lambda_.4} parent=35 // pred_fallthru
        _
      // Predicated region
      $region41: #{_lambda_.4} parent=35 // pred_check
        %p1453 = pneg %p166
      $region42: #{_lambda_.4} parent=35 // pred_check_branch
        %1455 = sbr.rel (%p1453) target = $region44
      $region43: #{_lambda_.4} parent=35 // pred_region
        _
      $region44: #{_lambda_.4} parent=35 // pred_fallthru
        _
    $region36: #{_lambda_.4} parent=5 // pred_fallthru
      _
    %p1456 = scmp.le.s32.totalorder 2, %s12
    // Predicated region
    $region45: #{_lambda_.4} parent=5 // pred_check
      %p1457 = pneg %p1456
    $region46: #{_lambda_.4} parent=5 // pred_check_branch
      %1459 = sbr.rel (%p1457) target = $region48
    $region47: #{_lambda_.4} parent=5 // pred_region
      %s1460 = ssub.s32 %s12, 2
      // Predicated region
      $region49: #{_lambda_.4} parent=47 // pred_check
        %p1461 = pneg %p144
      $region50: #{_lambda_.4} parent=47 // pred_check_branch
        %1463 = sbr.rel (%p1461) target = $region52
      $region51: #{_lambda_.4} parent=47 // pred_region
        %s1464 = smul.u32 4, %s24
        %p1465 = scmp.lt.s32.totalorder %s23, 1
        %s1466 = scalar_select %p1465, %s23, 1
        %p1467 = scmp.lt.s32.totalorder %s1464, 7
        %s1468 = scalar_select %p1467, %s1464, 7
        %s1469 = smul.addr %s1466, 8
        %s1470 = sadd.s32 %s1468, %s1469
        %s1471 = smul.addr %s1470, 4
        %s1472 = scalar_lea.vmem %s4, %s1471
      $region52: #{_lambda_.4} parent=47 // pred_fallthru
        _
      // Predicated region
      $region53: #{_lambda_.4} parent=47 // pred_check
        %p1473 = pneg %p172
      $region54: #{_lambda_.4} parent=47 // pred_check_branch
        %1475 = sbr.rel (%p1473) target = $region56
      $region55: #{_lambda_.4} parent=47 // pred_region
        %p1476 = scmp.lt.s32.totalorder %s23, 1
        %s1477 = scalar_select %p1476, %s23, 1
        %p1478 = scmp.lt.s32.totalorder %s24, 1
        %s1479 = scalar_select %p1478, %s24, 1
        %s1480 = smul.addr %s1477, 2
        %s1481 = sadd.s32 %s1479, %s1480
        %s1482 = smul.addr %s1481, 8
        %s1483 = scalar_lea.vmem %s5, %s1482
      $region56: #{_lambda_.4} parent=47 // pred_fallthru
        _
    $region48: #{_lambda_.4} parent=5 // pred_fallthru
      _
  $region6: #{_lambda_.4} parent=0 // loop_footer
    %s16 = sadd.s32 1, %s12
  $region7: #{_lambda_.4} parent=0 // loop_footer_branch
    %11 = sbr.rel target = $region3
  $region8: #{_lambda_.4} parent=0 // loop_exit
    _

</llo_original>
